<compile_context>
chip_gen: v7x
topology: tpu7x:2x2x1
jax: 0.10.0
libtpu: 0.0.40
codegen_flags: <defaults>
</compile_context>

<pallas_src>
import math

import jax
import jax.numpy as jnp
from jax.experimental import pallas as pl
from jax.experimental.pallas import tpu as pltpu

IMG_SHAPE = (1, 28, 28)
IMG_DIM = int(math.prod(IMG_SHAPE))        # 784
CONDITION_DIM = 10
HIDDEN = (512, 256, 128)
OUT_DIM = 1


def _disc_kernel(img_ref, cond_ref,
                 w1i_ref, w1c_ref, b1_ref,
                 w2_ref, b2_ref,
                 w3_ref, b3_ref,
                 w4_ref, b4_ref,
                 out_ref):
    """One batch tile of the 4-layer MLP, weights VMEM-resident across tiles."""
    # ---- Layer 1: split matmul (img part + condition part), no concat needed.
    x_img = img_ref[...].astype(jnp.bfloat16)     # (TB, 784)
    x_cond = cond_ref[...].astype(jnp.bfloat16)   # (TB, 10)
    h = jnp.dot(x_img, w1i_ref[...], preferred_element_type=jnp.float32)
    h = h + jnp.dot(x_cond, w1c_ref[...], preferred_element_type=jnp.float32)
    h = jnp.maximum(h + b1_ref[...], 0.0)         # (TB, 512) f32

    # ---- Layer 2
    h = jnp.dot(h.astype(jnp.bfloat16), w2_ref[...],
                preferred_element_type=jnp.float32)
    h = jnp.maximum(h + b2_ref[...], 0.0)         # (TB, 256) f32

    # ---- Layer 3
    h = jnp.dot(h.astype(jnp.bfloat16), w3_ref[...],
                preferred_element_type=jnp.float32)
    h = jnp.maximum(h + b3_ref[...], 0.0)         # (TB, 128) f32

    # ---- Layer 4 (128 -> 1): multiply + lane-reduce on VPU/XLU instead of an
    # N=1 matmul that would waste the MXU.
    w4_row = w4_ref[...].astype(jnp.float32)      # (1, 128)
    logit = jnp.sum(h * w4_row, axis=-1, keepdims=True) + b4_ref[...]  # (TB, 1)
    out_ref[...] = jax.nn.sigmoid(logit).astype(out_ref.dtype)


def discriminator_forward(img, condition, params, *, batch_tile=128):
    """img: (B, 1, 28, 28) f32, condition: (B, 10) f32 -> (B, 1) f32."""
    B = img.shape[0]
    img_flat = img.reshape(B, IMG_DIM)

    # Batch tile: MXU-friendly 128 rows for big batches, otherwise the
    # sublane-aligned (multiple of 8) padded batch.
    tb = batch_tile if B >= batch_tile else max(8, ((B + 7) // 8) * 8)
    b_pad = ((B + tb - 1) // tb) * tb
    if b_pad != B:
        pad = ((0, b_pad - B), (0, 0))
        img_flat = jnp.pad(img_flat, pad)
        condition = jnp.pad(condition, pad)
    num_tiles = b_pad // tb

    w1i, w1c, b1 = params["w1_img"], params["w1_cond"], params["b1"]
    w2, b2 = params["w2"], params["b2"]
    w3, b3 = params["w3"], params["b3"]
    w4, b4 = params["w4"], params["b4"]

    def resident(arr):
        # Same block every grid step -> no re-DMA, stays VMEM-resident.
        return pl.BlockSpec(arr.shape, lambda i: (0,) * arr.ndim)

    flops = 2 * b_pad * (IMG_DIM * 512 + CONDITION_DIM * 512
                         + 512 * 256 + 256 * 128 + 128)
    bytes_accessed = (
        img_flat.size * img_flat.dtype.itemsize
        + condition.size * condition.dtype.itemsize
        + sum(int(p.size) * p.dtype.itemsize
              for p in (w1i, w1c, b1, w2, b2, w3, b3, w4, b4))
        + b_pad * OUT_DIM * 4
    )

    out = pl.pallas_call(
        _disc_kernel,
        out_shape=jax.ShapeDtypeStruct((b_pad, OUT_DIM), jnp.float32),
        grid=(num_tiles,),
        in_specs=[
            pl.BlockSpec((tb, IMG_DIM), lambda i: (i, 0)),
            pl.BlockSpec((tb, CONDITION_DIM), lambda i: (i, 0)),
            resident(w1i), resident(w1c), resident(b1),
            resident(w2), resident(b2),
            resident(w3), resident(b3),
            resident(w4), resident(b4),
        ],
        out_specs=pl.BlockSpec((tb, OUT_DIM), lambda i: (i, 0)),
        compiler_params=pltpu.CompilerParams(
            # v7x: shard batch tiles across the 2 TensorCores; harmless on
            # v5e/v6e (single TC).
            dimension_semantics=("parallel",),
        ),
        cost_estimate=pl.CostEstimate(
            flops=flops, transcendentals=b_pad, bytes_accessed=bytes_accessed),
    )(img_flat, condition, w1i, w1c, b1, w2, b2, w3, b3, w4, b4)

    return out[:B]


def init_params(key):
    """PyTorch nn.Linear-style init (U[-1/sqrt(fan_in), 1/sqrt(fan_in)]).

    Weights stored as (in_features, out_features) in bf16; W1 is pre-split
    into the img / condition rows; W4 stored as a (1, 128) row; biases f32.
    """
    dims = (IMG_DIM + CONDITION_DIM,) + HIDDEN + (OUT_DIM,)
    ws, bs = [], []
    for i in range(len(dims) - 1):
        fan_in, fan_out = dims[i], dims[i + 1]
        key, kw, kb = jax.random.split(key, 3)
        bound = 1.0 / math.sqrt(fan_in)
        ws.append(jax.random.uniform(kw, (fan_in, fan_out), jnp.float32,
                                     -bound, bound))
        bs.append(jax.random.uniform(kb, (1, fan_out), jnp.float32,
                                     -bound, bound))
    w1, w2, w3, w4 = ws
    b1, b2, b3, b4 = bs
    return {
        "w1_img": w1[:IMG_DIM].astype(jnp.bfloat16),   # (784, 512)
        "w1_cond": w1[IMG_DIM:].astype(jnp.bfloat16),  # (10, 512)
        "b1": b1,                                      # (1, 512)
        "w2": w2.astype(jnp.bfloat16), "b2": b2,       # (512,256), (1,256)
        "w3": w3.astype(jnp.bfloat16), "b3": b3,       # (256,128), (1,128)
        "w4": w4.T.astype(jnp.bfloat16),               # (1, 128) row
        "b4": b4,                                      # (1, 1)
    }


def reference_forward(img, condition, params):
    """Pure-JAX reference mirroring the kernel's bf16/f32 mixed precision."""
    B = img.shape[0]
    x_img = img.reshape(B, IMG_DIM).astype(jnp.bfloat16)
    x_cond = condition.astype(jnp.bfloat16)
    h = (jnp.dot(x_img, params["w1_img"], preferred_element_type=jnp.float32)
         + jnp.dot(x_cond, params["w1_cond"], preferred_element_type=jnp.float32))
    h = jnp.maximum(h + params["b1"], 0.0)
    h = jnp.dot(h.astype(jnp.bfloat16), params["w2"],
                preferred_element_type=jnp.float32)
    h = jnp.maximum(h + params["b2"], 0.0)
    h = jnp.dot(h.astype(jnp.bfloat16), params["w3"],
                preferred_element_type=jnp.float32)
    h = jnp.maximum(h + params["b3"], 0.0)
    w4 = params["w4"].astype(jnp.float32)
    logit = jnp.sum(h * w4, axis=-1, keepdims=True) + params["b4"]
    return jax.nn.sigmoid(logit)


if __name__ == "__main__":
    key = jax.random.PRNGKey(0)
    k_img, k_cond, k_params = jax.random.split(key, 3)

    B = 8
    img = jax.random.normal(k_img, (B,) + IMG_SHAPE, jnp.float32)          # (8,1,28,28)
    condition = jax.random.normal(k_cond, (B, CONDITION_DIM), jnp.float32)  # (8,10)
    params = init_params(k_params)

    out = discriminator_forward(img, condition, params)
    out = jax.block_until_ready(out)

    ref = reference_forward(img, condition, params)
    assert out.shape == (B, OUT_DIM), out.shape
    assert jnp.allclose(out, ref, atol=2e-3, rtol=2e-3), (out, ref)

    print("KERNEL_OK")
</pallas_src>

<mosaic_0001>
module attributes {stable_mosaic.version = 11 : i64} {
  func.func @_disc_kernel(%arg0: i32, %arg1: memref<8x784xf32, #tpu.memory_space<vmem>>, %arg2: memref<8x10xf32, #tpu.memory_space<vmem>>, %arg3: memref<784x512xbf16, #tpu.memory_space<vmem>>, %arg4: memref<10x512xbf16, #tpu.memory_space<vmem>>, %arg5: memref<1x512xf32, #tpu.memory_space<vmem>>, %arg6: memref<512x256xbf16, #tpu.memory_space<vmem>>, %arg7: memref<1x256xf32, #tpu.memory_space<vmem>>, %arg8: memref<256x128xbf16, #tpu.memory_space<vmem>>, %arg9: memref<1x128xf32, #tpu.memory_space<vmem>>, %arg10: memref<1x128xbf16, #tpu.memory_space<vmem>>, %arg11: memref<1x1xf32, #tpu.memory_space<vmem>>, %arg12: memref<8x1xf32, #tpu.memory_space<vmem>>) attributes {dimension_semantics = [#tpu.dimension_semantics<parallel>], iteration_bounds = array<i64: 1>, scalar_prefetch = 0 : i64, scratch_operands = 0 : i64, tpu.core_type = #tpu.core_type<tc>, window_params = [{transform_indices = @transform_0, window_bounds = array<i64: 8, 784>}, {transform_indices = @transform_1, window_bounds = array<i64: 8, 10>}, {pipeline_mode = #tpu.pipeline_mode<synchronous>, transform_indices = @transform_2, window_bounds = array<i64: 784, 512>}, {pipeline_mode = #tpu.pipeline_mode<synchronous>, transform_indices = @transform_3, window_bounds = array<i64: 10, 512>}, {pipeline_mode = #tpu.pipeline_mode<synchronous>, transform_indices = @transform_4, window_bounds = array<i64: 1, 512>}, {pipeline_mode = #tpu.pipeline_mode<synchronous>, transform_indices = @transform_5, window_bounds = array<i64: 512, 256>}, {pipeline_mode = #tpu.pipeline_mode<synchronous>, transform_indices = @transform_6, window_bounds = array<i64: 1, 256>}, {pipeline_mode = #tpu.pipeline_mode<synchronous>, transform_indices = @transform_7, window_bounds = array<i64: 256, 128>}, {pipeline_mode = #tpu.pipeline_mode<synchronous>, transform_indices = @transform_8, window_bounds = array<i64: 1, 128>}, {pipeline_mode = #tpu.pipeline_mode<synchronous>, transform_indices = @transform_9, window_bounds = array<i64: 1, 128>}, {pipeline_mode = #tpu.pipeline_mode<synchronous>, transform_indices = @transform_10, window_bounds = array<i64: 1, 1>}, {transform_indices = @transform_11, window_bounds = array<i64: 8, 1>}]} {
    %c0 = arith.constant 0 : index
    %c0_0 = arith.constant 0 : index
    %0 = vector.load %arg1[%c0, %c0_0] : memref<8x784xf32, #tpu.memory_space<vmem>>, vector<8x784xf32>
    %1 = arith.truncf %0 : vector<8x784xf32> to vector<8x784xbf16>
    %c0_1 = arith.constant 0 : index
    %c0_2 = arith.constant 0 : index
    %2 = vector.load %arg2[%c0_1, %c0_2] : memref<8x10xf32, #tpu.memory_space<vmem>>, vector<8x10xf32>
    %3 = arith.truncf %2 : vector<8x10xf32> to vector<8x10xbf16>
    %c0_3 = arith.constant 0 : index
    %c0_4 = arith.constant 0 : index
    %4 = vector.load %arg3[%c0_3, %c0_4] : memref<784x512xbf16, #tpu.memory_space<vmem>>, vector<784x512xbf16>
    %cst = arith.constant dense<0.000000e+00> : vector<8x512xf32>
    %5 = tpu.matmul %1, %4, %cst {dimension_numbers = #tpu.dot_dimension_numbers<[1], [0], [0], [1], [0, 0, 1, 1], [], []>} : vector<8x784xbf16>, vector<784x512xbf16>, vector<8x512xf32> -> vector<8x512xf32>
    %c0_5 = arith.constant 0 : index
    %c0_6 = arith.constant 0 : index
    %6 = vector.load %arg4[%c0_5, %c0_6] : memref<10x512xbf16, #tpu.memory_space<vmem>>, vector<10x512xbf16>
    %cst_7 = arith.constant dense<0.000000e+00> : vector<8x512xf32>
    %7 = tpu.matmul %3, %6, %cst_7 {dimension_numbers = #tpu.dot_dimension_numbers<[1], [0], [0], [1], [0, 0, 1, 1], [], []>} : vector<8x10xbf16>, vector<10x512xbf16>, vector<8x512xf32> -> vector<8x512xf32>
    %8 = arith.addf %5, %7 : vector<8x512xf32>
    %c0_8 = arith.constant 0 : index
    %c0_9 = arith.constant 0 : index
    %9 = vector.load %arg5[%c0_8, %c0_9] : memref<1x512xf32, #tpu.memory_space<vmem>>, vector<1x512xf32>
    %10 = vector.broadcast %9 : vector<1x512xf32> to vector<8x512xf32>
    %11 = arith.addf %8, %10 : vector<8x512xf32>
    %cst_10 = arith.constant 0.000000e+00 : f32
    %12 = vector.broadcast %cst_10 : f32 to vector<8x512xf32>
    %13 = arith.maximumf %11, %12 : vector<8x512xf32>
    %14 = arith.truncf %13 : vector<8x512xf32> to vector<8x512xbf16>
    %c0_11 = arith.constant 0 : index
    %c0_12 = arith.constant 0 : index
    %15 = vector.load %arg6[%c0_11, %c0_12] : memref<512x256xbf16, #tpu.memory_space<vmem>>, vector<512x256xbf16>
    %cst_13 = arith.constant dense<0.000000e+00> : vector<8x256xf32>
    %16 = tpu.matmul %14, %15, %cst_13 {dimension_numbers = #tpu.dot_dimension_numbers<[1], [0], [0], [1], [0, 0, 1, 1], [], []>} : vector<8x512xbf16>, vector<512x256xbf16>, vector<8x256xf32> -> vector<8x256xf32>
    %c0_14 = arith.constant 0 : index
    %c0_15 = arith.constant 0 : index
    %17 = vector.load %arg7[%c0_14, %c0_15] : memref<1x256xf32, #tpu.memory_space<vmem>>, vector<1x256xf32>
    %18 = vector.broadcast %17 : vector<1x256xf32> to vector<8x256xf32>
    %19 = arith.addf %16, %18 : vector<8x256xf32>
    %cst_16 = arith.constant 0.000000e+00 : f32
    %20 = vector.broadcast %cst_16 : f32 to vector<8x256xf32>
    %21 = arith.maximumf %19, %20 : vector<8x256xf32>
    %22 = arith.truncf %21 : vector<8x256xf32> to vector<8x256xbf16>
    %c0_17 = arith.constant 0 : index
    %c0_18 = arith.constant 0 : index
    %23 = vector.load %arg8[%c0_17, %c0_18] : memref<256x128xbf16, #tpu.memory_space<vmem>>, vector<256x128xbf16>
    %cst_19 = arith.constant dense<0.000000e+00> : vector<8x128xf32>
    %24 = tpu.matmul %22, %23, %cst_19 {dimension_numbers = #tpu.dot_dimension_numbers<[1], [0], [0], [1], [0, 0, 1, 1], [], []>} : vector<8x256xbf16>, vector<256x128xbf16>, vector<8x128xf32> -> vector<8x128xf32>
    %c0_20 = arith.constant 0 : index
    %c0_21 = arith.constant 0 : index
    %25 = vector.load %arg9[%c0_20, %c0_21] : memref<1x128xf32, #tpu.memory_space<vmem>>, vector<1x128xf32>
    %26 = vector.broadcast %25 : vector<1x128xf32> to vector<8x128xf32>
    %27 = arith.addf %24, %26 : vector<8x128xf32>
    %cst_22 = arith.constant 0.000000e+00 : f32
    %28 = vector.broadcast %cst_22 : f32 to vector<8x128xf32>
    %29 = arith.maximumf %27, %28 : vector<8x128xf32>
    %c0_23 = arith.constant 0 : index
    %c0_24 = arith.constant 0 : index
    %30 = vector.load %arg10[%c0_23, %c0_24] : memref<1x128xbf16, #tpu.memory_space<vmem>>, vector<1x128xbf16>
    %31 = arith.extf %30 : vector<1x128xbf16> to vector<1x128xf32>
    %32 = vector.broadcast %31 : vector<1x128xf32> to vector<8x128xf32>
    %33 = arith.mulf %29, %32 : vector<8x128xf32>
    %cst_25 = arith.constant dense<0.000000e+00> : vector<8xf32>
    %34 = vector.multi_reduction <add>, %33, %cst_25 [1] : vector<8x128xf32> to vector<8xf32>
    %35 = vector.shape_cast %34 : vector<8xf32> to vector<8x1xf32>
    %c0_26 = arith.constant 0 : index
    %c0_27 = arith.constant 0 : index
    %36 = vector.load %arg11[%c0_26, %c0_27] : memref<1x1xf32, #tpu.memory_space<vmem>>, vector<1x1xf32>
    %37 = vector.broadcast %36 : vector<1x1xf32> to vector<8x1xf32>
    %38 = arith.addf %35, %37 : vector<8x1xf32>
    %39 = arith.negf %38 : vector<8x1xf32>
    %40 = math.exp %39 : vector<8x1xf32>
    %cst_28 = arith.constant 1.000000e+00 : f32
    %41 = vector.broadcast %cst_28 : f32 to vector<8x1xf32>
    %42 = arith.addf %41, %40 : vector<8x1xf32>
    %43 = arith.divf %41, %42 : vector<8x1xf32>
    %c0_29 = arith.constant 0 : index
    %c0_30 = arith.constant 0 : index
    %44 = vector.load %arg12[%c0_29, %c0_30] : memref<8x1xf32, #tpu.memory_space<vmem>>, vector<8x1xf32>
    tpu.vector_store %arg12[%c0_29, %c0_30], %43 {strides = array<i32>} : memref<8x1xf32, #tpu.memory_space<vmem>>, vector<8x1xf32>,
    return
  }
  func.func @transform_0(%arg0: i32) -> (i32, i32) {
    %c0_i32 = arith.constant 0 : i32
    %c0_i32_0 = arith.constant 0 : i32
    return %arg0, %c0_i32 : i32, i32
  }
  func.func @transform_1(%arg0: i32) -> (i32, i32) {
    %c0_i32 = arith.constant 0 : i32
    %c0_i32_0 = arith.constant 0 : i32
    return %arg0, %c0_i32 : i32, i32
  }
  func.func @transform_2(%arg0: i32) -> (i32, i32) {
    %c0_i32 = arith.constant 0 : i32
    %c0_i32_0 = arith.constant 0 : i32
    %c0_i32_1 = arith.constant 0 : i32
    return %c0_i32, %c0_i32_0 : i32, i32
  }
  func.func @transform_3(%arg0: i32) -> (i32, i32) {
    %c0_i32 = arith.constant 0 : i32
    %c0_i32_0 = arith.constant 0 : i32
    %c0_i32_1 = arith.constant 0 : i32
    return %c0_i32, %c0_i32_0 : i32, i32
  }
  func.func @transform_4(%arg0: i32) -> (i32, i32) {
    %c0_i32 = arith.constant 0 : i32
    %c0_i32_0 = arith.constant 0 : i32
    %c0_i32_1 = arith.constant 0 : i32
    return %c0_i32, %c0_i32_0 : i32, i32
  }
  func.func @transform_5(%arg0: i32) -> (i32, i32) {
    %c0_i32 = arith.constant 0 : i32
    %c0_i32_0 = arith.constant 0 : i32
    %c0_i32_1 = arith.constant 0 : i32
    return %c0_i32, %c0_i32_0 : i32, i32
  }
  func.func @transform_6(%arg0: i32) -> (i32, i32) {
    %c0_i32 = arith.constant 0 : i32
    %c0_i32_0 = arith.constant 0 : i32
    %c0_i32_1 = arith.constant 0 : i32
    return %c0_i32, %c0_i32_0 : i32, i32
  }
  func.func @transform_7(%arg0: i32) -> (i32, i32) {
    %c0_i32 = arith.constant 0 : i32
    %c0_i32_0 = arith.constant 0 : i32
    %c0_i32_1 = arith.constant 0 : i32
    return %c0_i32, %c0_i32_0 : i32, i32
  }
  func.func @transform_8(%arg0: i32) -> (i32, i32) {
    %c0_i32 = arith.constant 0 : i32
    %c0_i32_0 = arith.constant 0 : i32
    %c0_i32_1 = arith.constant 0 : i32
    return %c0_i32, %c0_i32_0 : i32, i32
  }
  func.func @transform_9(%arg0: i32) -> (i32, i32) {
    %c0_i32 = arith.constant 0 : i32
    %c0_i32_0 = arith.constant 0 : i32
    %c0_i32_1 = arith.constant 0 : i32
    return %c0_i32, %c0_i32_0 : i32, i32
  }
  func.func @transform_10(%arg0: i32) -> (i32, i32) {
    %c0_i32 = arith.constant 0 : i32
    %c0_i32_0 = arith.constant 0 : i32
    %c0_i32_1 = arith.constant 0 : i32
    return %c0_i32, %c0_i32_0 : i32, i32
  }
  func.func @transform_11(%arg0: i32) -> (i32, i32) {
    %c0_i32 = arith.constant 0 : i32
    %c0_i32_0 = arith.constant 0 : i32
    return %arg0, %c0_i32 : i32, i32
  }
}

</mosaic_0001>

<llo_original>
// kernel: tpu_custom_call.1
$region0: #{tpu_custom_call.1}
  #allocation0 [shape = 'u32[]', space=smem, size = 0x4, offset = 0x4, fixed_abs, tag = 'smem constant byte address 0x4 - core index']
  #allocation1 [shape = 'u32[144,128]{1,0:T(1,128)}', space=vmem, size = 0x12000, scoped, tag = 'internal scratch']
  #allocation2 [shape = 'f32[1,1]{1,0:T(1,128)S(1)}', space=vmem, size = 0x200, scoped, tag = 'scoped memory for tpu_custom_call.1']
  %s0 = inlined_call_operand.hbm [shape: f32[8,784], index: 0, kind: input, shape index: {}]
  %s1 = inlined_call_operand.hbm [shape: f32[8,10], index: 1, kind: input, shape index: {}]
  %s2 = inlined_call_operand.hbm [shape: bf16[784,512], index: 2, kind: input, shape index: {}]
  %s3 = inlined_call_operand.hbm [shape: bf16[10,512], index: 3, kind: input, shape index: {}]
  %s4 = inlined_call_operand.vmem [shape: f32[1,512], index: 4, kind: input, shape index: {}]
  %s5 = inlined_call_operand.hbm [shape: bf16[512,256], index: 5, kind: input, shape index: {}]
  %s6 = inlined_call_operand.vmem [shape: f32[1,256], index: 6, kind: input, shape index: {}]
  %s7 = inlined_call_operand.hbm [shape: bf16[256,128], index: 7, kind: input, shape index: {}]
  %s8 = inlined_call_operand.vmem [shape: f32[1,128], index: 8, kind: input, shape index: {}]
  %s9 = inlined_call_operand.vmem [shape: bf16[1,128], index: 9, kind: input, shape index: {}]
  %s10 = inlined_call_operand.<no memory space> [shape: f32[1,1], index: 10, kind: input, shape index: {}]
  %s11 = inlined_call_operand.vmem [shape: f32[8,1], index: 11, kind: output, shape index: {}]
  %s12 = sld [smem:[#allocation0]]
  $region78: #{tpu_custom_call.1} parent=0
    _
  %s14 = ssub.s32 1, %s12
  %s15 = scalar_select 0, %s14, %s12
  %v16 = vstv %s10
  %17 = vst [vmem:[#allocation2] sm:$0x1] %v16
  $region1: #{tpu_custom_call.1} parent=0
    #allocation3 [shape = 'u8[28672]{0}', space=vmem, size = 0x7000, scoped, tag = 'input window, operand 0, single buffered']
    #allocation4 [shape = 's32[1]{0}', space=sflag, size = 0x4, scoped, tag = 'scoped memory for tpu_custom_call.1']
    #allocation5 [shape = 'u8[4096]{0}', space=vmem, size = 0x1000, scoped, tag = 'input window, operand 1, single buffered']
    #allocation6 [shape = 's32[1]{0}', space=sflag, size = 0x4, scoped, tag = 'scoped memory for tpu_custom_call.1']
    #allocation7 [shape = 'u8[802816]{0}', space=vmem, size = 0xc4000, scoped, tag = 'input window, operand 2, single buffered']
    #allocation8 [shape = 'u8[16384]{0}', space=vmem, size = 0x4000, scoped, tag = 'input window, operand 3, single buffered']
    #allocation9 [shape = 's32[1]{0}', space=sflag, size = 0x4, scoped, tag = 'scoped memory for tpu_custom_call.1']
    #allocation10 [shape = 'u8[262144]{0}', space=vmem, size = 0x40000, scoped, tag = 'input window, operand 5, single buffered']
    #allocation11 [shape = 'u8[65536]{0}', space=vmem, size = 0x10000, scoped, tag = 'input window, operand 7, single buffered']
    #allocation12 [shape = 's32[1]{0}', space=sflag, size = 0x4, scoped, tag = 'scoped memory for tpu_custom_call.1']
    %18 = vsyncpa [#allocation4], 0
    %19 = vsyncpa [#allocation6], 0
    %20 = vsyncpa [#allocation9], 0
    %21 = vsyncpa [#allocation12], 0
    // Predicated region
    $region2: #{tpu_custom_call.1} parent=1 // pred_check
      _
    $region3: #{tpu_custom_call.1} parent=1 // pred_check_branch
      %23 = sbr.rel (0) target = $region5
    $region4: #{tpu_custom_call.1} parent=1 // pred_region
      %s25 = ssub.s32 896, 896
      %26 = vsyncadd [#allocation4], %s25
      %s28 = sshll.u32 [#allocation3], 4
      %s29 = int_to_ptr.vmem [resolvable:$true] %s28
      %31 = dma.hbm_to_vmem [thread:$0]  %s0, 896, %s29, [#allocation4]
    $region5: #{tpu_custom_call.1} parent=1 // pred_fallthru
      _
    // Predicated region
    $region6: #{tpu_custom_call.1} parent=1 // pred_check
      _
    $region7: #{tpu_custom_call.1} parent=1 // pred_check_branch
      %33 = sbr.rel (0) target = $region9
    $region8: #{tpu_custom_call.1} parent=1 // pred_region
      %s35 = ssub.s32 128, 128
      %36 = vsyncadd [#allocation6], %s35
      %s38 = sshll.u32 [#allocation5], 4
      %s39 = int_to_ptr.vmem [resolvable:$true] %s38
      %41 = dma.hbm_to_vmem [thread:$0]  %s1, 128, %s39, [#allocation6]
    $region9: #{tpu_custom_call.1} parent=1 // pred_fallthru
      _
    // Predicated region
    $region10: #{tpu_custom_call.1} parent=1 // pred_check
      _
    $region11: #{tpu_custom_call.1} parent=1 // pred_check_branch
      %43 = sbr.rel (0) target = $region13
    $region12: #{tpu_custom_call.1} parent=1 // pred_region
      %s45 = ssub.s32 25088, 25088
      %46 = vsyncadd [#allocation6], %s45
      %s47 = sshll.u32 [#allocation7], 4
      %s48 = int_to_ptr.vmem [resolvable:$true] %s47
      %53 = dma.hbm_to_vmem [thread:$0]  %s2, 25088, %s48, [#allocation6], 256, 256, 16
    $region13: #{tpu_custom_call.1} parent=1 // pred_fallthru
      _
    // Predicated region
    $region14: #{tpu_custom_call.1} parent=1 // pred_check
      _
    $region15: #{tpu_custom_call.1} parent=1 // pred_check_branch
      %55 = sbr.rel (0) target = $region17
    $region16: #{tpu_custom_call.1} parent=1 // pred_region
      %s57 = ssub.s32 512, 512
      %58 = vsyncadd [#allocation9], %s57
      %s59 = sshll.u32 [#allocation8], 4
      %s60 = int_to_ptr.vmem [resolvable:$true] %s59
      %65 = dma.hbm_to_vmem [thread:$0]  %s3, 512, %s60, [#allocation9], 256, 256, 16
    $region17: #{tpu_custom_call.1} parent=1 // pred_fallthru
      _
    // Predicated region
    $region18: #{tpu_custom_call.1} parent=1 // pred_check
      _
    $region19: #{tpu_custom_call.1} parent=1 // pred_check_branch
      %67 = sbr.rel (0) target = $region21
    $region20: #{tpu_custom_call.1} parent=1 // pred_region
      _
    $region21: #{tpu_custom_call.1} parent=1 // pred_fallthru
      _
    // Predicated region
    $region22: #{tpu_custom_call.1} parent=1 // pred_check
      _
    $region23: #{tpu_custom_call.1} parent=1 // pred_check_branch
      %69 = sbr.rel (0) target = $region25
    $region24: #{tpu_custom_call.1} parent=1 // pred_region
      %s71 = ssub.s32 8192, 8192
      %72 = vsyncadd [#allocation9], %s71
      %s73 = sshll.u32 [#allocation10], 4
      %s74 = int_to_ptr.vmem [resolvable:$true] %s73
      %79 = dma.hbm_to_vmem [thread:$0]  %s5, 8192, %s74, [#allocation9], 128, 128, 8
    $region25: #{tpu_custom_call.1} parent=1 // pred_fallthru
      _
    // Predicated region
    $region26: #{tpu_custom_call.1} parent=1 // pred_check
      _
    $region27: #{tpu_custom_call.1} parent=1 // pred_check_branch
      %81 = sbr.rel (0) target = $region29
    $region28: #{tpu_custom_call.1} parent=1 // pred_region
      _
    $region29: #{tpu_custom_call.1} parent=1 // pred_fallthru
      _
    // Predicated region
    $region30: #{tpu_custom_call.1} parent=1 // pred_check
      _
    $region31: #{tpu_custom_call.1} parent=1 // pred_check_branch
      %83 = sbr.rel (0) target = $region33
    $region32: #{tpu_custom_call.1} parent=1 // pred_region
      %s85 = ssub.s32 2048, 2048
      %86 = vsyncadd [#allocation12], %s85
      %s87 = sshll.u32 [#allocation11], 4
      %s88 = int_to_ptr.vmem [resolvable:$true] %s87
      %93 = dma.hbm_to_vmem [thread:$0]  %s7, 2048, %s88, [#allocation12], 64, 64, 4
    $region33: #{tpu_custom_call.1} parent=1 // pred_fallthru
      _
    // Predicated region
    $region34: #{tpu_custom_call.1} parent=1 // pred_check
      _
    $region35: #{tpu_custom_call.1} parent=1 // pred_check_branch
      %95 = sbr.rel (0) target = $region37
    $region36: #{tpu_custom_call.1} parent=1 // pred_region
      _
    $region37: #{tpu_custom_call.1} parent=1 // pred_fallthru
      _
    // Predicated region
    $region38: #{tpu_custom_call.1} parent=1 // pred_check
      _
    $region39: #{tpu_custom_call.1} parent=1 // pred_check_branch
      %97 = sbr.rel (0) target = $region41
    $region40: #{tpu_custom_call.1} parent=1 // pred_region
      _
    $region41: #{tpu_custom_call.1} parent=1 // pred_fallthru
      _
    // Predicated region
    $region42: #{tpu_custom_call.1} parent=1 // pred_check
      _
    $region43: #{tpu_custom_call.1} parent=1 // pred_check_branch
      %99 = sbr.rel (0) target = $region45
    $region44: #{tpu_custom_call.1} parent=1 // pred_region
      _
    $region45: #{tpu_custom_call.1} parent=1 // pred_fallthru
      _
    // Predicated region
    $region46: #{tpu_custom_call.1} parent=1 // pred_check
      _
    $region47: #{tpu_custom_call.1} parent=1 // pred_check_branch
      %101 = sbr.rel (0) target = $region49
    $region48: #{tpu_custom_call.1} parent=1 // pred_region
      %102 = dma.done [#allocation4], 896
    $region49: #{tpu_custom_call.1} parent=1 // pred_fallthru
      _
    // Predicated region
    $region50: #{tpu_custom_call.1} parent=1 // pred_check
      _
    $region51: #{tpu_custom_call.1} parent=1 // pred_check_branch
      %104 = sbr.rel (0) target = $region53
    $region52: #{tpu_custom_call.1} parent=1 // pred_region
      %105 = dma.done [#allocation6], 128
    $region53: #{tpu_custom_call.1} parent=1 // pred_fallthru
      _
    // Predicated region
    $region54: #{tpu_custom_call.1} parent=1 // pred_check
      _
    $region55: #{tpu_custom_call.1} parent=1 // pred_check_branch
      %107 = sbr.rel (0) target = $region57
    $region56: #{tpu_custom_call.1} parent=1 // pred_region
      %108 = dma.done [#allocation6], 25088
    $region57: #{tpu_custom_call.1} parent=1 // pred_fallthru
      _
    // Predicated region
    $region58: #{tpu_custom_call.1} parent=1 // pred_check
      _
    $region59: #{tpu_custom_call.1} parent=1 // pred_check_branch
      %110 = sbr.rel (0) target = $region61
    $region60: #{tpu_custom_call.1} parent=1 // pred_region
      %111 = dma.done [#allocation9], 512
    $region61: #{tpu_custom_call.1} parent=1 // pred_fallthru
      _
    // Predicated region
    $region62: #{tpu_custom_call.1} parent=1 // pred_check
      _
    $region63: #{tpu_custom_call.1} parent=1 // pred_check_branch
      %113 = sbr.rel (0) target = $region65
    $region64: #{tpu_custom_call.1} parent=1 // pred_region
      %114 = dma.done [#allocation9], 8192
    $region65: #{tpu_custom_call.1} parent=1 // pred_fallthru
      _
    // Predicated region
    $region66: #{tpu_custom_call.1} parent=1 // pred_check
      _
    $region67: #{tpu_custom_call.1} parent=1 // pred_check_branch
      %116 = sbr.rel (0) target = $region69
    $region68: #{tpu_custom_call.1} parent=1 // pred_region
      %117 = dma.done [#allocation12], 2048
    $region69: #{tpu_custom_call.1} parent=1 // pred_fallthru
      _
    %v119 = vld [vmem:[#allocation3] sm:$0xff]
    %v120 = vld [vmem:[#allocation3 + $0x8] sm:$0xff]
    %v121 = vld [vmem:[#allocation3 + $0x10] sm:$0xff]
    %v122 = vld [vmem:[#allocation3 + $0x18] sm:$0xff]
    %v123 = vld [vmem:[#allocation3 + $0x20] sm:$0xff]
    %v124 = vld [vmem:[#allocation3 + $0x28] sm:$0xff]
    %v125 = vld [vmem:[#allocation3 + $0x30] sm:$0xff]
    %v126 = vpack.c.bf16 %v119, %v119
    %v127 = vpack.c.bf16 %v120, %v120
    %v128 = vpack.c.bf16 %v121, %v121
    %v129 = vpack.c.bf16 %v122, %v122
    %v130 = vpack.c.bf16 %v123, %v123
    %v131 = vpack.c.bf16 %v124, %v124
    %v132 = vpack.c.bf16 %v125, %v125
    %v133 = vld [vmem:[#allocation5] sm:$0xff]
    %v134 = vpack.c.bf16 %v133, %v133
    %v135 = vld [vmem:[#allocation7] sm:$0xff]
    %v136 = vld [vmem:[#allocation7 + $0x8] sm:$0xff]
    %v137 = vld [vmem:[#allocation7 + $0x10] sm:$0xff]
    %v138 = vld [vmem:[#allocation7 + $0x18] sm:$0xff]
    %v139 = vld [vmem:[#allocation7 + $0x20] sm:$0xff]
    %v140 = vld [vmem:[#allocation7 + $0x28] sm:$0xff]
    %v141 = vld [vmem:[#allocation7 + $0x30] sm:$0xff]
    %v142 = vld [vmem:[#allocation7 + $0x38] sm:$0xff]
    %v143 = vld [vmem:[#allocation7 + $0x40] sm:$0xff]
    %v144 = vld [vmem:[#allocation7 + $0x48] sm:$0xff]
    %v145 = vld [vmem:[#allocation7 + $0x50] sm:$0xff]
    %v146 = vld [vmem:[#allocation7 + $0x58] sm:$0xff]
    %v147 = vld [vmem:[#allocation7 + $0x60] sm:$0xff]
    %v148 = vld [vmem:[#allocation7 + $0x68] sm:$0xff]
    %v149 = vld [vmem:[#allocation7 + $0x70] sm:$0xff]
    %v150 = vld [vmem:[#allocation7 + $0x78] sm:$0xff]
    %v151 = vld [vmem:[#allocation7 + $0x80] sm:$0xff]
    %v152 = vld [vmem:[#allocation7 + $0x88] sm:$0xff]
    %v153 = vld [vmem:[#allocation7 + $0x90] sm:$0xff]
    %v154 = vld [vmem:[#allocation7 + $0x98] sm:$0xff]
    %v155 = vld [vmem:[#allocation7 + $0xa0] sm:$0xff]
    %v156 = vld [vmem:[#allocation7 + $0xa8] sm:$0xff]
    %v157 = vld [vmem:[#allocation7 + $0xb0] sm:$0xff]
    %v158 = vld [vmem:[#allocation7 + $0xb8] sm:$0xff]
    %v159 = vld [vmem:[#allocation7 + $0xc0] sm:$0xff]
    %v160 = vld [vmem:[#allocation7 + $0xc8] sm:$0xff]
    %v161 = vld [vmem:[#allocation7 + $0xd0] sm:$0xff]
    %v162 = vld [vmem:[#allocation7 + $0xd8] sm:$0xff]
    %v163 = vld [vmem:[#allocation7 + $0xe0] sm:$0xff]
    %v164 = vld [vmem:[#allocation7 + $0xe8] sm:$0xff]
    %v165 = vld [vmem:[#allocation7 + $0xf0] sm:$0xff]
    %v166 = vld [vmem:[#allocation7 + $0xf8] sm:$0xff]
    %v167 = vld [vmem:[#allocation7 + $0x100] sm:$0xff]
    %v168 = vld [vmem:[#allocation7 + $0x108] sm:$0xff]
    %v169 = vld [vmem:[#allocation7 + $0x110] sm:$0xff]
    %v170 = vld [vmem:[#allocation7 + $0x118] sm:$0xff]
    %v171 = vld [vmem:[#allocation7 + $0x120] sm:$0xff]
    %v172 = vld [vmem:[#allocation7 + $0x128] sm:$0xff]
    %v173 = vld [vmem:[#allocation7 + $0x130] sm:$0xff]
    %v174 = vld [vmem:[#allocation7 + $0x138] sm:$0xff]
    %v175 = vld [vmem:[#allocation7 + $0x140] sm:$0xff]
    %v176 = vld [vmem:[#allocation7 + $0x148] sm:$0xff]
    %v177 = vld [vmem:[#allocation7 + $0x150] sm:$0xff]
    %v178 = vld [vmem:[#allocation7 + $0x158] sm:$0xff]
    %v179 = vld [vmem:[#allocation7 + $0x160] sm:$0xff]
    %v180 = vld [vmem:[#allocation7 + $0x168] sm:$0xff]
    %v181 = vld [vmem:[#allocation7 + $0x170] sm:$0xff]
    %v182 = vld [vmem:[#allocation7 + $0x178] sm:$0xff]
    %v183 = vld [vmem:[#allocation7 + $0x180] sm:$0xff]
    %v184 = vld [vmem:[#allocation7 + $0x188] sm:$0xff]
    %v185 = vld [vmem:[#allocation7 + $0x190] sm:$0xff]
    %v186 = vld [vmem:[#allocation7 + $0x198] sm:$0xff]
    %v187 = vld [vmem:[#allocation7 + $0x1a0] sm:$0xff]
    %v188 = vld [vmem:[#allocation7 + $0x1a8] sm:$0xff]
    %v189 = vld [vmem:[#allocation7 + $0x1b0] sm:$0xff]
    %v190 = vld [vmem:[#allocation7 + $0x1b8] sm:$0xff]
    %v191 = vld [vmem:[#allocation7 + $0x1c0] sm:$0xff]
    %v192 = vld [vmem:[#allocation7 + $0x1c8] sm:$0xff]
    %v193 = vld [vmem:[#allocation7 + $0x1d0] sm:$0xff]
    %v194 = vld [vmem:[#allocation7 + $0x1d8] sm:$0xff]
    %v195 = vld [vmem:[#allocation7 + $0x1e0] sm:$0xff]
    %v196 = vld [vmem:[#allocation7 + $0x1e8] sm:$0xff]
    %v197 = vld [vmem:[#allocation7 + $0x1f0] sm:$0xff]
    %v198 = vld [vmem:[#allocation7 + $0x1f8] sm:$0xff]
    %v199 = vld [vmem:[#allocation7 + $0x200] sm:$0xff]
    %v200 = vld [vmem:[#allocation7 + $0x208] sm:$0xff]
    %v201 = vld [vmem:[#allocation7 + $0x210] sm:$0xff]
    %v202 = vld [vmem:[#allocation7 + $0x218] sm:$0xff]
    %v203 = vld [vmem:[#allocation7 + $0x220] sm:$0xff]
    %v204 = vld [vmem:[#allocation7 + $0x228] sm:$0xff]
    %v205 = vld [vmem:[#allocation7 + $0x230] sm:$0xff]
    %v206 = vld [vmem:[#allocation7 + $0x238] sm:$0xff]
    %v207 = vld [vmem:[#allocation7 + $0x240] sm:$0xff]
    %v208 = vld [vmem:[#allocation7 + $0x248] sm:$0xff]
    %v209 = vld [vmem:[#allocation7 + $0x250] sm:$0xff]
    %v210 = vld [vmem:[#allocation7 + $0x258] sm:$0xff]
    %v211 = vld [vmem:[#allocation7 + $0x260] sm:$0xff]
    %v212 = vld [vmem:[#allocation7 + $0x268] sm:$0xff]
    %v213 = vld [vmem:[#allocation7 + $0x270] sm:$0xff]
    %v214 = vld [vmem:[#allocation7 + $0x278] sm:$0xff]
    %v215 = vld [vmem:[#allocation7 + $0x280] sm:$0xff]
    %v216 = vld [vmem:[#allocation7 + $0x288] sm:$0xff]
    %v217 = vld [vmem:[#allocation7 + $0x290] sm:$0xff]
    %v218 = vld [vmem:[#allocation7 + $0x298] sm:$0xff]
    %v219 = vld [vmem:[#allocation7 + $0x2a0] sm:$0xff]
    %v220 = vld [vmem:[#allocation7 + $0x2a8] sm:$0xff]
    %v221 = vld [vmem:[#allocation7 + $0x2b0] sm:$0xff]
    %v222 = vld [vmem:[#allocation7 + $0x2b8] sm:$0xff]
    %v223 = vld [vmem:[#allocation7 + $0x2c0] sm:$0xff]
    %v224 = vld [vmem:[#allocation7 + $0x2c8] sm:$0xff]
    %v225 = vld [vmem:[#allocation7 + $0x2d0] sm:$0xff]
    %v226 = vld [vmem:[#allocation7 + $0x2d8] sm:$0xff]
    %v227 = vld [vmem:[#allocation7 + $0x2e0] sm:$0xff]
    %v228 = vld [vmem:[#allocation7 + $0x2e8] sm:$0xff]
    %v229 = vld [vmem:[#allocation7 + $0x2f0] sm:$0xff]
    %v230 = vld [vmem:[#allocation7 + $0x2f8] sm:$0xff]
    %v231 = vld [vmem:[#allocation7 + $0x300] sm:$0xff]
    %v232 = vld [vmem:[#allocation7 + $0x308] sm:$0xff]
    %v233 = vld [vmem:[#allocation7 + $0x310] sm:$0xff]
    %v234 = vld [vmem:[#allocation7 + $0x318] sm:$0xff]
    %v235 = vld [vmem:[#allocation7 + $0x320] sm:$0xff]
    %v236 = vld [vmem:[#allocation7 + $0x328] sm:$0xff]
    %v237 = vld [vmem:[#allocation7 + $0x330] sm:$0xff]
    %v238 = vld [vmem:[#allocation7 + $0x338] sm:$0xff]
    %v239 = vld [vmem:[#allocation7 + $0x340] sm:$0xff]
    %v240 = vld [vmem:[#allocation7 + $0x348] sm:$0xff]
    %v241 = vld [vmem:[#allocation7 + $0x350] sm:$0xff]
    %v242 = vld [vmem:[#allocation7 + $0x358] sm:$0xff]
    %v243 = vld [vmem:[#allocation7 + $0x360] sm:$0xff]
    %v244 = vld [vmem:[#allocation7 + $0x368] sm:$0xff]
    %v245 = vld [vmem:[#allocation7 + $0x370] sm:$0xff]
    %v246 = vld [vmem:[#allocation7 + $0x378] sm:$0xff]
    %v247 = vld [vmem:[#allocation7 + $0x380] sm:$0xff]
    %v248 = vld [vmem:[#allocation7 + $0x388] sm:$0xff]
    %v249 = vld [vmem:[#allocation7 + $0x390] sm:$0xff]
    %v250 = vld [vmem:[#allocation7 + $0x398] sm:$0xff]
    %v251 = vld [vmem:[#allocation7 + $0x3a0] sm:$0xff]
    %v252 = vld [vmem:[#allocation7 + $0x3a8] sm:$0xff]
    %v253 = vld [vmem:[#allocation7 + $0x3b0] sm:$0xff]
    %v254 = vld [vmem:[#allocation7 + $0x3b8] sm:$0xff]
    %v255 = vld [vmem:[#allocation7 + $0x3c0] sm:$0xff]
    %v256 = vld [vmem:[#allocation7 + $0x3c8] sm:$0xff]
    %v257 = vld [vmem:[#allocation7 + $0x3d0] sm:$0xff]
    %v258 = vld [vmem:[#allocation7 + $0x3d8] sm:$0xff]
    %v259 = vld [vmem:[#allocation7 + $0x3e0] sm:$0xff]
    %v260 = vld [vmem:[#allocation7 + $0x3e8] sm:$0xff]
    %v261 = vld [vmem:[#allocation7 + $0x3f0] sm:$0xff]
    %v262 = vld [vmem:[#allocation7 + $0x3f8] sm:$0xff]
    %v263 = vld [vmem:[#allocation7 + $0x400] sm:$0xff]
    %v264 = vld [vmem:[#allocation7 + $0x408] sm:$0xff]
    %v265 = vld [vmem:[#allocation7 + $0x410] sm:$0xff]
    %v266 = vld [vmem:[#allocation7 + $0x418] sm:$0xff]
    %v267 = vld [vmem:[#allocation7 + $0x420] sm:$0xff]
    %v268 = vld [vmem:[#allocation7 + $0x428] sm:$0xff]
    %v269 = vld [vmem:[#allocation7 + $0x430] sm:$0xff]
    %v270 = vld [vmem:[#allocation7 + $0x438] sm:$0xff]
    %v271 = vld [vmem:[#allocation7 + $0x440] sm:$0xff]
    %v272 = vld [vmem:[#allocation7 + $0x448] sm:$0xff]
    %v273 = vld [vmem:[#allocation7 + $0x450] sm:$0xff]
    %v274 = vld [vmem:[#allocation7 + $0x458] sm:$0xff]
    %v275 = vld [vmem:[#allocation7 + $0x460] sm:$0xff]
    %v276 = vld [vmem:[#allocation7 + $0x468] sm:$0xff]
    %v277 = vld [vmem:[#allocation7 + $0x470] sm:$0xff]
    %v278 = vld [vmem:[#allocation7 + $0x478] sm:$0xff]
    %v279 = vld [vmem:[#allocation7 + $0x480] sm:$0xff]
    %v280 = vld [vmem:[#allocation7 + $0x488] sm:$0xff]
    %v281 = vld [vmem:[#allocation7 + $0x490] sm:$0xff]
    %v282 = vld [vmem:[#allocation7 + $0x498] sm:$0xff]
    %v283 = vld [vmem:[#allocation7 + $0x4a0] sm:$0xff]
    %v284 = vld [vmem:[#allocation7 + $0x4a8] sm:$0xff]
    %v285 = vld [vmem:[#allocation7 + $0x4b0] sm:$0xff]
    %v286 = vld [vmem:[#allocation7 + $0x4b8] sm:$0xff]
    %v287 = vld [vmem:[#allocation7 + $0x4c0] sm:$0xff]
    %v288 = vld [vmem:[#allocation7 + $0x4c8] sm:$0xff]
    %v289 = vld [vmem:[#allocation7 + $0x4d0] sm:$0xff]
    %v290 = vld [vmem:[#allocation7 + $0x4d8] sm:$0xff]
    %v291 = vld [vmem:[#allocation7 + $0x4e0] sm:$0xff]
    %v292 = vld [vmem:[#allocation7 + $0x4e8] sm:$0xff]
    %v293 = vld [vmem:[#allocation7 + $0x4f0] sm:$0xff]
    %v294 = vld [vmem:[#allocation7 + $0x4f8] sm:$0xff]
    %v295 = vld [vmem:[#allocation7 + $0x500] sm:$0xff]
    %v296 = vld [vmem:[#allocation7 + $0x508] sm:$0xff]
    %v297 = vld [vmem:[#allocation7 + $0x510] sm:$0xff]
    %v298 = vld [vmem:[#allocation7 + $0x518] sm:$0xff]
    %v299 = vld [vmem:[#allocation7 + $0x520] sm:$0xff]
    %v300 = vld [vmem:[#allocation7 + $0x528] sm:$0xff]
    %v301 = vld [vmem:[#allocation7 + $0x530] sm:$0xff]
    %v302 = vld [vmem:[#allocation7 + $0x538] sm:$0xff]
    %v303 = vld [vmem:[#allocation7 + $0x540] sm:$0xff]
    %v304 = vld [vmem:[#allocation7 + $0x548] sm:$0xff]
    %v305 = vld [vmem:[#allocation7 + $0x550] sm:$0xff]
    %v306 = vld [vmem:[#allocation7 + $0x558] sm:$0xff]
    %v307 = vld [vmem:[#allocation7 + $0x560] sm:$0xff]
    %v308 = vld [vmem:[#allocation7 + $0x568] sm:$0xff]
    %v309 = vld [vmem:[#allocation7 + $0x570] sm:$0xff]
    %v310 = vld [vmem:[#allocation7 + $0x578] sm:$0xff]
    %v311 = vld [vmem:[#allocation7 + $0x580] sm:$0xff]
    %v312 = vld [vmem:[#allocation7 + $0x588] sm:$0xff]
    %v313 = vld [vmem:[#allocation7 + $0x590] sm:$0xff]
    %v314 = vld [vmem:[#allocation7 + $0x598] sm:$0xff]
    %v315 = vld [vmem:[#allocation7 + $0x5a0] sm:$0xff]
    %v316 = vld [vmem:[#allocation7 + $0x5a8] sm:$0xff]
    %v317 = vld [vmem:[#allocation7 + $0x5b0] sm:$0xff]
    %v318 = vld [vmem:[#allocation7 + $0x5b8] sm:$0xff]
    %v319 = vld [vmem:[#allocation7 + $0x5c0] sm:$0xff]
    %v320 = vld [vmem:[#allocation7 + $0x5c8] sm:$0xff]
    %v321 = vld [vmem:[#allocation7 + $0x5d0] sm:$0xff]
    %v322 = vld [vmem:[#allocation7 + $0x5d8] sm:$0xff]
    %v323 = vld [vmem:[#allocation7 + $0x5e0] sm:$0xff]
    %v324 = vld [vmem:[#allocation7 + $0x5e8] sm:$0xff]
    %v325 = vld [vmem:[#allocation7 + $0x5f0] sm:$0xff]
    %v326 = vld [vmem:[#allocation7 + $0x5f8] sm:$0xff]
    %v327 = vld [vmem:[#allocation7 + $0x600] sm:$0xff]
    %v328 = vld [vmem:[#allocation7 + $0x608] sm:$0xff]
    %v329 = vld [vmem:[#allocation7 + $0x610] sm:$0xff]
    %v330 = vld [vmem:[#allocation7 + $0x618] sm:$0xff]
    %v331 = vld [vmem:[#allocation8] sm:$0xff]
    %v332 = vld [vmem:[#allocation8 + $0x8] sm:$0xff]
    %v333 = vld [vmem:[#allocation8 + $0x10] sm:$0x11]
    %v334 = vld [vmem:[#allocation8 + $0x18] sm:$0x11]
    %v339 = vunpack.c.l.b16 %v331
    %v340 = vunpack.c.h.b16 %v331
    %v341 = vunpack.c.l.b16 %v332
    %v342 = vunpack.c.h.b16 %v332
    %v343 = vunpack.c.l.b16 %v333
    %v344 = vunpack.c.h.b16 %v333
    %v345 = vunpack.c.l.b16 %v334
    %v346 = vunpack.c.h.b16 %v334
    %v347 = vpack.c.b16 %v343, %v339
    %v348 = vpack.c.b16 %v344, %v340
    %v349 = vpack.c.b16 %v345, %v341
    %v350 = vpack.c.b16 %v346, %v342
    %vm351 = vcmask 80896
    %v353 = vsel %vm351, %v134, 0
    %vm355 = vcmask 1044480
    %v357 = vsel %vm355, %v347, 0
    %v360 = vsel %vm355, %v348, 0
    %v363 = vsel %vm355, %v349, 0
    %v366 = vsel %vm355, %v350, 0
    %368 = vmatprep.subr.bf16.mxu0 %v360
    %369 = vmatpush1.bf16.msra.mxu0 %v357
    %370 = vmatprep.subr.bf16.mxu0 0
    %371 = vmatpush1.bf16.msra.mxu0 0
    %372 = vmatprep.subr.bf16.mxu0 0
    %373 = vmatpush1.bf16.msra.mxu0 0
    %374 = vmatprep.subr.bf16.mxu0 0
    %375 = vmatpush1.bf16.msra.mxu0 0
    %376 = vmatprep.subr.bf16.mxu0 0
    %377 = vmatpush1.bf16.msra.mxu0 0
    %378 = vmatprep.subr.bf16.mxu0 0
    %379 = vmatpush1.bf16.msra.mxu0 0
    %380 = vmatprep.subr.bf16.mxu0 0
    %381 = vmatpush1.bf16.msra.mxu0 0
    %382 = vmatprep.subr.bf16.mxu0 0
    %383 = vmatpush1.bf16.msra.mxu0 0
    %384 = vmatprep.subr.bf16.mxu0 0
    %385 = vmatpush1.bf16.msra.mxu0 0
    %386 = vmatprep.subr.bf16.mxu0 0
    %387 = vmatpush1.bf16.msra.mxu0 0
    %388 = vmatprep.subr.bf16.mxu0 0
    %389 = vmatpush1.bf16.msra.mxu0 0
    %390 = vmatprep.subr.bf16.mxu0 0
    %391 = vmatpush1.bf16.msra.mxu0 0
    %392 = vmatprep.subr.bf16.mxu0 0
    %393 = vmatpush1.bf16.msra.mxu0 0
    %394 = vmatprep.subr.bf16.mxu0 0
    %395 = vmatpush1.bf16.msra.mxu0 0
    %396 = vmatprep.subr.bf16.mxu0 0
    %397 = vmatpush1.bf16.msra.mxu0 0
    %398 = vmatprep.subr.bf16.mxu0 0
    %399 = vmatpush1.bf16.msra.mxu0 0
    %400 = vmatprep.mubr.bf16.mxu0 0
    %401 = vmatmul.mubr.bf16.gmra.mrb[0].mxu0 %v353
    %v402 = vpop.f32.mrb[0].mxu0
    %v403 = vadd.f32 0.0, %v402
    %v404 = vpop.f32.mrb[0].mxu0
    %v405 = vadd.f32 0.0, %v404
    %v406 = vpop.f32.mrb[0].mxu0
    %v407 = vpop.f32.mrb[0].mxu0
    %408 = vdwg.mxu0
    %409 = vmatprep.subr.bf16.mxu0 %v366
    %410 = vmatpush1.bf16.msra.mxu0 %v363
    %411 = vmatprep.subr.bf16.mxu0 0
    %412 = vmatpush1.bf16.msra.mxu0 0
    %413 = vmatprep.subr.bf16.mxu0 0
    %414 = vmatpush1.bf16.msra.mxu0 0
    %415 = vmatprep.subr.bf16.mxu0 0
    %416 = vmatpush1.bf16.msra.mxu0 0
    %417 = vmatprep.subr.bf16.mxu0 0
    %418 = vmatpush1.bf16.msra.mxu0 0
    %419 = vmatprep.subr.bf16.mxu0 0
    %420 = vmatpush1.bf16.msra.mxu0 0
    %421 = vmatprep.subr.bf16.mxu0 0
    %422 = vmatpush1.bf16.msra.mxu0 0
    %423 = vmatprep.subr.bf16.mxu0 0
    %424 = vmatpush1.bf16.msra.mxu0 0
    %425 = vmatprep.subr.bf16.mxu0 0
    %426 = vmatpush1.bf16.msra.mxu0 0
    %427 = vmatprep.subr.bf16.mxu0 0
    %428 = vmatpush1.bf16.msra.mxu0 0
    %429 = vmatprep.subr.bf16.mxu0 0
    %430 = vmatpush1.bf16.msra.mxu0 0
    %431 = vmatprep.subr.bf16.mxu0 0
    %432 = vmatpush1.bf16.msra.mxu0 0
    %433 = vmatprep.subr.bf16.mxu0 0
    %434 = vmatpush1.bf16.msra.mxu0 0
    %435 = vmatprep.subr.bf16.mxu0 0
    %436 = vmatpush1.bf16.msra.mxu0 0
    %437 = vmatprep.subr.bf16.mxu0 0
    %438 = vmatpush1.bf16.msra.mxu0 0
    %439 = vmatprep.subr.bf16.mxu0 0
    %440 = vmatpush1.bf16.msra.mxu0 0
    %441 = vmatprep.mubr.bf16.mxu0 0
    %442 = vmatmul.mubr.bf16.gmra.mrb[0].mxu0 %v353
    %v443 = vpop.f32.mrb[0].mxu0
    %v444 = vadd.f32 0.0, %v443
    %v445 = vpop.f32.mrb[0].mxu0
    %v446 = vadd.f32 0.0, %v445
    %v447 = vpop.f32.mrb[0].mxu0
    %v448 = vpop.f32.mrb[0].mxu0
    %449 = vdwg.mxu0
    %v646 = vunpack.c.l.b16 %v135
    %v647 = vunpack.c.h.b16 %v135
    %v648 = vunpack.c.l.b16 %v136
    %v649 = vunpack.c.h.b16 %v136
    %v650 = vunpack.c.l.b16 %v137
    %v651 = vunpack.c.h.b16 %v137
    %v652 = vunpack.c.l.b16 %v138
    %v653 = vunpack.c.h.b16 %v138
    %v654 = vunpack.c.l.b16 %v139
    %v655 = vunpack.c.h.b16 %v139
    %v656 = vunpack.c.l.b16 %v140
    %v657 = vunpack.c.h.b16 %v140
    %v658 = vunpack.c.l.b16 %v141
    %v659 = vunpack.c.h.b16 %v141
    %v660 = vunpack.c.l.b16 %v142
    %v661 = vunpack.c.h.b16 %v142
    %v662 = vunpack.c.l.b16 %v143
    %v663 = vunpack.c.h.b16 %v143
    %v664 = vunpack.c.l.b16 %v144
    %v665 = vunpack.c.h.b16 %v144
    %v666 = vunpack.c.l.b16 %v145
    %v667 = vunpack.c.h.b16 %v145
    %v668 = vunpack.c.l.b16 %v146
    %v669 = vunpack.c.h.b16 %v146
    %v670 = vunpack.c.l.b16 %v147
    %v671 = vunpack.c.h.b16 %v147
    %v672 = vunpack.c.l.b16 %v148
    %v673 = vunpack.c.h.b16 %v148
    %v674 = vunpack.c.l.b16 %v149
    %v675 = vunpack.c.h.b16 %v149
    %v676 = vunpack.c.l.b16 %v150
    %v677 = vunpack.c.h.b16 %v150
    %v678 = vunpack.c.l.b16 %v151
    %v679 = vunpack.c.h.b16 %v151
    %v680 = vunpack.c.l.b16 %v152
    %v681 = vunpack.c.h.b16 %v152
    %v682 = vunpack.c.l.b16 %v153
    %v683 = vunpack.c.h.b16 %v153
    %v684 = vunpack.c.l.b16 %v154
    %v685 = vunpack.c.h.b16 %v154
    %v686 = vunpack.c.l.b16 %v155
    %v687 = vunpack.c.h.b16 %v155
    %v688 = vunpack.c.l.b16 %v156
    %v689 = vunpack.c.h.b16 %v156
    %v690 = vunpack.c.l.b16 %v157
    %v691 = vunpack.c.h.b16 %v157
    %v692 = vunpack.c.l.b16 %v158
    %v693 = vunpack.c.h.b16 %v158
    %v694 = vunpack.c.l.b16 %v159
    %v695 = vunpack.c.h.b16 %v159
    %v696 = vunpack.c.l.b16 %v160
    %v697 = vunpack.c.h.b16 %v160
    %v698 = vunpack.c.l.b16 %v161
    %v699 = vunpack.c.h.b16 %v161
    %v700 = vunpack.c.l.b16 %v162
    %v701 = vunpack.c.h.b16 %v162
    %v702 = vunpack.c.l.b16 %v163
    %v703 = vunpack.c.h.b16 %v163
    %v704 = vunpack.c.l.b16 %v164
    %v705 = vunpack.c.h.b16 %v164
    %v706 = vunpack.c.l.b16 %v165
    %v707 = vunpack.c.h.b16 %v165
    %v708 = vunpack.c.l.b16 %v166
    %v709 = vunpack.c.h.b16 %v166
    %v710 = vunpack.c.l.b16 %v167
    %v711 = vunpack.c.h.b16 %v167
    %v712 = vunpack.c.l.b16 %v168
    %v713 = vunpack.c.h.b16 %v168
    %v714 = vunpack.c.l.b16 %v169
    %v715 = vunpack.c.h.b16 %v169
    %v716 = vunpack.c.l.b16 %v170
    %v717 = vunpack.c.h.b16 %v170
    %v718 = vunpack.c.l.b16 %v171
    %v719 = vunpack.c.h.b16 %v171
    %v720 = vunpack.c.l.b16 %v172
    %v721 = vunpack.c.h.b16 %v172
    %v722 = vunpack.c.l.b16 %v173
    %v723 = vunpack.c.h.b16 %v173
    %v724 = vunpack.c.l.b16 %v174
    %v725 = vunpack.c.h.b16 %v174
    %v726 = vunpack.c.l.b16 %v175
    %v727 = vunpack.c.h.b16 %v175
    %v728 = vunpack.c.l.b16 %v176
    %v729 = vunpack.c.h.b16 %v176
    %v730 = vunpack.c.l.b16 %v177
    %v731 = vunpack.c.h.b16 %v177
    %v732 = vunpack.c.l.b16 %v178
    %v733 = vunpack.c.h.b16 %v178
    %v734 = vunpack.c.l.b16 %v179
    %v735 = vunpack.c.h.b16 %v179
    %v736 = vunpack.c.l.b16 %v180
    %v737 = vunpack.c.h.b16 %v180
    %v738 = vunpack.c.l.b16 %v181
    %v739 = vunpack.c.h.b16 %v181
    %v740 = vunpack.c.l.b16 %v182
    %v741 = vunpack.c.h.b16 %v182
    %v742 = vunpack.c.l.b16 %v183
    %v743 = vunpack.c.h.b16 %v183
    %v744 = vunpack.c.l.b16 %v184
    %v745 = vunpack.c.h.b16 %v184
    %v746 = vunpack.c.l.b16 %v185
    %v747 = vunpack.c.h.b16 %v185
    %v748 = vunpack.c.l.b16 %v186
    %v749 = vunpack.c.h.b16 %v186
    %v750 = vunpack.c.l.b16 %v187
    %v751 = vunpack.c.h.b16 %v187
    %v752 = vunpack.c.l.b16 %v188
    %v753 = vunpack.c.h.b16 %v188
    %v754 = vunpack.c.l.b16 %v189
    %v755 = vunpack.c.h.b16 %v189
    %v756 = vunpack.c.l.b16 %v190
    %v757 = vunpack.c.h.b16 %v190
    %v758 = vunpack.c.l.b16 %v191
    %v759 = vunpack.c.h.b16 %v191
    %v760 = vunpack.c.l.b16 %v192
    %v761 = vunpack.c.h.b16 %v192
    %v762 = vunpack.c.l.b16 %v193
    %v763 = vunpack.c.h.b16 %v193
    %v764 = vunpack.c.l.b16 %v194
    %v765 = vunpack.c.h.b16 %v194
    %v766 = vunpack.c.l.b16 %v195
    %v767 = vunpack.c.h.b16 %v195
    %v768 = vunpack.c.l.b16 %v196
    %v769 = vunpack.c.h.b16 %v196
    %v770 = vunpack.c.l.b16 %v197
    %v771 = vunpack.c.h.b16 %v197
    %v772 = vunpack.c.l.b16 %v198
    %v773 = vunpack.c.h.b16 %v198
    %v774 = vunpack.c.l.b16 %v199
    %v775 = vunpack.c.h.b16 %v199
    %v776 = vunpack.c.l.b16 %v200
    %v777 = vunpack.c.h.b16 %v200
    %v778 = vunpack.c.l.b16 %v201
    %v779 = vunpack.c.h.b16 %v201
    %v780 = vunpack.c.l.b16 %v202
    %v781 = vunpack.c.h.b16 %v202
    %v782 = vunpack.c.l.b16 %v203
    %v783 = vunpack.c.h.b16 %v203
    %v784 = vunpack.c.l.b16 %v204
    %v785 = vunpack.c.h.b16 %v204
    %v786 = vunpack.c.l.b16 %v205
    %v787 = vunpack.c.h.b16 %v205
    %v788 = vunpack.c.l.b16 %v206
    %v789 = vunpack.c.h.b16 %v206
    %v790 = vunpack.c.l.b16 %v207
    %v791 = vunpack.c.h.b16 %v207
    %v792 = vunpack.c.l.b16 %v208
    %v793 = vunpack.c.h.b16 %v208
    %v794 = vunpack.c.l.b16 %v209
    %v795 = vunpack.c.h.b16 %v209
    %v796 = vunpack.c.l.b16 %v210
    %v797 = vunpack.c.h.b16 %v210
    %v798 = vunpack.c.l.b16 %v211
    %v799 = vunpack.c.h.b16 %v211
    %v800 = vunpack.c.l.b16 %v212
    %v801 = vunpack.c.h.b16 %v212
    %v802 = vunpack.c.l.b16 %v213
    %v803 = vunpack.c.h.b16 %v213
    %v804 = vunpack.c.l.b16 %v214
    %v805 = vunpack.c.h.b16 %v214
    %v806 = vunpack.c.l.b16 %v215
    %v807 = vunpack.c.h.b16 %v215
    %v808 = vunpack.c.l.b16 %v216
    %v809 = vunpack.c.h.b16 %v216
    %v810 = vunpack.c.l.b16 %v217
    %v811 = vunpack.c.h.b16 %v217
    %v812 = vunpack.c.l.b16 %v218
    %v813 = vunpack.c.h.b16 %v218
    %v814 = vunpack.c.l.b16 %v219
    %v815 = vunpack.c.h.b16 %v219
    %v816 = vunpack.c.l.b16 %v220
    %v817 = vunpack.c.h.b16 %v220
    %v818 = vunpack.c.l.b16 %v221
    %v819 = vunpack.c.h.b16 %v221
    %v820 = vunpack.c.l.b16 %v222
    %v821 = vunpack.c.h.b16 %v222
    %v822 = vunpack.c.l.b16 %v223
    %v823 = vunpack.c.h.b16 %v223
    %v824 = vunpack.c.l.b16 %v224
    %v825 = vunpack.c.h.b16 %v224
    %v826 = vunpack.c.l.b16 %v225
    %v827 = vunpack.c.h.b16 %v225
    %v828 = vunpack.c.l.b16 %v226
    %v829 = vunpack.c.h.b16 %v226
    %v830 = vunpack.c.l.b16 %v227
    %v831 = vunpack.c.h.b16 %v227
    %v832 = vunpack.c.l.b16 %v228
    %v833 = vunpack.c.h.b16 %v228
    %v834 = vunpack.c.l.b16 %v229
    %v835 = vunpack.c.h.b16 %v229
    %v836 = vunpack.c.l.b16 %v230
    %v837 = vunpack.c.h.b16 %v230
    %v838 = vunpack.c.l.b16 %v231
    %v839 = vunpack.c.h.b16 %v231
    %v840 = vunpack.c.l.b16 %v232
    %v841 = vunpack.c.h.b16 %v232
    %v842 = vunpack.c.l.b16 %v233
    %v843 = vunpack.c.h.b16 %v233
    %v844 = vunpack.c.l.b16 %v234
    %v845 = vunpack.c.h.b16 %v234
    %v846 = vunpack.c.l.b16 %v235
    %v847 = vunpack.c.h.b16 %v235
    %v848 = vunpack.c.l.b16 %v236
    %v849 = vunpack.c.h.b16 %v236
    %v850 = vunpack.c.l.b16 %v237
    %v851 = vunpack.c.h.b16 %v237
    %v852 = vunpack.c.l.b16 %v238
    %v853 = vunpack.c.h.b16 %v238
    %v854 = vunpack.c.l.b16 %v239
    %v855 = vunpack.c.h.b16 %v239
    %v856 = vunpack.c.l.b16 %v240
    %v857 = vunpack.c.h.b16 %v240
    %v858 = vunpack.c.l.b16 %v241
    %v859 = vunpack.c.h.b16 %v241
    %v860 = vunpack.c.l.b16 %v242
    %v861 = vunpack.c.h.b16 %v242
    %v862 = vunpack.c.l.b16 %v243
    %v863 = vunpack.c.h.b16 %v243
    %v864 = vunpack.c.l.b16 %v244
    %v865 = vunpack.c.h.b16 %v244
    %v866 = vunpack.c.l.b16 %v245
    %v867 = vunpack.c.h.b16 %v245
    %v868 = vunpack.c.l.b16 %v246
    %v869 = vunpack.c.h.b16 %v246
    %v870 = vunpack.c.l.b16 %v247
    %v871 = vunpack.c.h.b16 %v247
    %v872 = vunpack.c.l.b16 %v248
    %v873 = vunpack.c.h.b16 %v248
    %v874 = vunpack.c.l.b16 %v249
    %v875 = vunpack.c.h.b16 %v249
    %v876 = vunpack.c.l.b16 %v250
    %v877 = vunpack.c.h.b16 %v250
    %v878 = vunpack.c.l.b16 %v251
    %v879 = vunpack.c.h.b16 %v251
    %v880 = vunpack.c.l.b16 %v252
    %v881 = vunpack.c.h.b16 %v252
    %v882 = vunpack.c.l.b16 %v253
    %v883 = vunpack.c.h.b16 %v253
    %v884 = vunpack.c.l.b16 %v254
    %v885 = vunpack.c.h.b16 %v254
    %v886 = vunpack.c.l.b16 %v255
    %v887 = vunpack.c.h.b16 %v255
    %v888 = vunpack.c.l.b16 %v256
    %v889 = vunpack.c.h.b16 %v256
    %v890 = vunpack.c.l.b16 %v257
    %v891 = vunpack.c.h.b16 %v257
    %v892 = vunpack.c.l.b16 %v258
    %v893 = vunpack.c.h.b16 %v258
    %v894 = vunpack.c.l.b16 %v259
    %v895 = vunpack.c.h.b16 %v259
    %v896 = vunpack.c.l.b16 %v260
    %v897 = vunpack.c.h.b16 %v260
    %v898 = vunpack.c.l.b16 %v261
    %v899 = vunpack.c.h.b16 %v261
    %v900 = vunpack.c.l.b16 %v262
    %v901 = vunpack.c.h.b16 %v262
    %v902 = vunpack.c.l.b16 %v263
    %v903 = vunpack.c.h.b16 %v263
    %v904 = vunpack.c.l.b16 %v264
    %v905 = vunpack.c.h.b16 %v264
    %v906 = vunpack.c.l.b16 %v265
    %v907 = vunpack.c.h.b16 %v265
    %v908 = vunpack.c.l.b16 %v266
    %v909 = vunpack.c.h.b16 %v266
    %v910 = vunpack.c.l.b16 %v267
    %v911 = vunpack.c.h.b16 %v267
    %v912 = vunpack.c.l.b16 %v268
    %v913 = vunpack.c.h.b16 %v268
    %v914 = vunpack.c.l.b16 %v269
    %v915 = vunpack.c.h.b16 %v269
    %v916 = vunpack.c.l.b16 %v270
    %v917 = vunpack.c.h.b16 %v270
    %v918 = vunpack.c.l.b16 %v271
    %v919 = vunpack.c.h.b16 %v271
    %v920 = vunpack.c.l.b16 %v272
    %v921 = vunpack.c.h.b16 %v272
    %v922 = vunpack.c.l.b16 %v273
    %v923 = vunpack.c.h.b16 %v273
    %v924 = vunpack.c.l.b16 %v274
    %v925 = vunpack.c.h.b16 %v274
    %v926 = vunpack.c.l.b16 %v275
    %v927 = vunpack.c.h.b16 %v275
    %v928 = vunpack.c.l.b16 %v276
    %v929 = vunpack.c.h.b16 %v276
    %v930 = vunpack.c.l.b16 %v277
    %v931 = vunpack.c.h.b16 %v277
    %v932 = vunpack.c.l.b16 %v278
    %v933 = vunpack.c.h.b16 %v278
    %v934 = vunpack.c.l.b16 %v279
    %v935 = vunpack.c.h.b16 %v279
    %v936 = vunpack.c.l.b16 %v280
    %v937 = vunpack.c.h.b16 %v280
    %v938 = vunpack.c.l.b16 %v281
    %v939 = vunpack.c.h.b16 %v281
    %v940 = vunpack.c.l.b16 %v282
    %v941 = vunpack.c.h.b16 %v282
    %v942 = vunpack.c.l.b16 %v283
    %v943 = vunpack.c.h.b16 %v283
    %v944 = vunpack.c.l.b16 %v284
    %v945 = vunpack.c.h.b16 %v284
    %v946 = vunpack.c.l.b16 %v285
    %v947 = vunpack.c.h.b16 %v285
    %v948 = vunpack.c.l.b16 %v286
    %v949 = vunpack.c.h.b16 %v286
    %v950 = vunpack.c.l.b16 %v287
    %v951 = vunpack.c.h.b16 %v287
    %v952 = vunpack.c.l.b16 %v288
    %v953 = vunpack.c.h.b16 %v288
    %v954 = vunpack.c.l.b16 %v289
    %v955 = vunpack.c.h.b16 %v289
    %v956 = vunpack.c.l.b16 %v290
    %v957 = vunpack.c.h.b16 %v290
    %v958 = vunpack.c.l.b16 %v291
    %v959 = vunpack.c.h.b16 %v291
    %v960 = vunpack.c.l.b16 %v292
    %v961 = vunpack.c.h.b16 %v292
    %v962 = vunpack.c.l.b16 %v293
    %v963 = vunpack.c.h.b16 %v293
    %v964 = vunpack.c.l.b16 %v294
    %v965 = vunpack.c.h.b16 %v294
    %v966 = vunpack.c.l.b16 %v295
    %v967 = vunpack.c.h.b16 %v295
    %v968 = vunpack.c.l.b16 %v296
    %v969 = vunpack.c.h.b16 %v296
    %v970 = vunpack.c.l.b16 %v297
    %v971 = vunpack.c.h.b16 %v297
    %v972 = vunpack.c.l.b16 %v298
    %v973 = vunpack.c.h.b16 %v298
    %v974 = vunpack.c.l.b16 %v299
    %v975 = vunpack.c.h.b16 %v299
    %v976 = vunpack.c.l.b16 %v300
    %v977 = vunpack.c.h.b16 %v300
    %v978 = vunpack.c.l.b16 %v301
    %v979 = vunpack.c.h.b16 %v301
    %v980 = vunpack.c.l.b16 %v302
    %v981 = vunpack.c.h.b16 %v302
    %v982 = vunpack.c.l.b16 %v303
    %v983 = vunpack.c.h.b16 %v303
    %v984 = vunpack.c.l.b16 %v304
    %v985 = vunpack.c.h.b16 %v304
    %v986 = vunpack.c.l.b16 %v305
    %v987 = vunpack.c.h.b16 %v305
    %v988 = vunpack.c.l.b16 %v306
    %v989 = vunpack.c.h.b16 %v306
    %v990 = vunpack.c.l.b16 %v307
    %v991 = vunpack.c.h.b16 %v307
    %v992 = vunpack.c.l.b16 %v308
    %v993 = vunpack.c.h.b16 %v308
    %v994 = vunpack.c.l.b16 %v309
    %v995 = vunpack.c.h.b16 %v309
    %v996 = vunpack.c.l.b16 %v310
    %v997 = vunpack.c.h.b16 %v310
    %v998 = vunpack.c.l.b16 %v311
    %v999 = vunpack.c.h.b16 %v311
    %v1000 = vunpack.c.l.b16 %v312
    %v1001 = vunpack.c.h.b16 %v312
    %v1002 = vunpack.c.l.b16 %v313
    %v1003 = vunpack.c.h.b16 %v313
    %v1004 = vunpack.c.l.b16 %v314
    %v1005 = vunpack.c.h.b16 %v314
    %v1006 = vunpack.c.l.b16 %v315
    %v1007 = vunpack.c.h.b16 %v315
    %v1008 = vunpack.c.l.b16 %v316
    %v1009 = vunpack.c.h.b16 %v316
    %v1010 = vunpack.c.l.b16 %v317
    %v1011 = vunpack.c.h.b16 %v317
    %v1012 = vunpack.c.l.b16 %v318
    %v1013 = vunpack.c.h.b16 %v318
    %v1014 = vunpack.c.l.b16 %v319
    %v1015 = vunpack.c.h.b16 %v319
    %v1016 = vunpack.c.l.b16 %v320
    %v1017 = vunpack.c.h.b16 %v320
    %v1018 = vunpack.c.l.b16 %v321
    %v1019 = vunpack.c.h.b16 %v321
    %v1020 = vunpack.c.l.b16 %v322
    %v1021 = vunpack.c.h.b16 %v322
    %v1022 = vunpack.c.l.b16 %v323
    %v1023 = vunpack.c.h.b16 %v323
    %v1024 = vunpack.c.l.b16 %v324
    %v1025 = vunpack.c.h.b16 %v324
    %v1026 = vunpack.c.l.b16 %v325
    %v1027 = vunpack.c.h.b16 %v325
    %v1028 = vunpack.c.l.b16 %v326
    %v1029 = vunpack.c.h.b16 %v326
    %v1030 = vunpack.c.l.b16 %v327
    %v1031 = vunpack.c.h.b16 %v327
    %v1032 = vunpack.c.l.b16 %v328
    %v1033 = vunpack.c.h.b16 %v328
    %v1034 = vunpack.c.l.b16 %v329
    %v1035 = vunpack.c.h.b16 %v329
    %v1036 = vunpack.c.l.b16 %v330
    %v1037 = vunpack.c.h.b16 %v330
    %v1038 = vpack.c.b16 %v650, %v646
    %v1039 = vpack.c.b16 %v651, %v647
    %v1040 = vpack.c.b16 %v652, %v648
    %v1041 = vpack.c.b16 %v653, %v649
    %v1042 = vpack.c.b16 %v658, %v654
    %v1043 = vpack.c.b16 %v659, %v655
    %v1044 = vpack.c.b16 %v660, %v656
    %v1045 = vpack.c.b16 %v661, %v657
    %v1046 = vpack.c.b16 %v666, %v662
    %v1047 = vpack.c.b16 %v667, %v663
    %v1048 = vpack.c.b16 %v668, %v664
    %v1049 = vpack.c.b16 %v669, %v665
    %v1050 = vpack.c.b16 %v674, %v670
    %v1051 = vpack.c.b16 %v675, %v671
    %v1052 = vpack.c.b16 %v676, %v672
    %v1053 = vpack.c.b16 %v677, %v673
    %v1054 = vpack.c.b16 %v682, %v678
    %v1055 = vpack.c.b16 %v683, %v679
    %v1056 = vpack.c.b16 %v684, %v680
    %v1057 = vpack.c.b16 %v685, %v681
    %v1058 = vpack.c.b16 %v690, %v686
    %v1059 = vpack.c.b16 %v691, %v687
    %v1060 = vpack.c.b16 %v692, %v688
    %v1061 = vpack.c.b16 %v693, %v689
    %v1062 = vpack.c.b16 %v698, %v694
    %v1063 = vpack.c.b16 %v699, %v695
    %v1064 = vpack.c.b16 %v700, %v696
    %v1065 = vpack.c.b16 %v701, %v697
    %v1066 = vpack.c.b16 %v706, %v702
    %v1067 = vpack.c.b16 %v707, %v703
    %v1068 = vpack.c.b16 %v708, %v704
    %v1069 = vpack.c.b16 %v709, %v705
    %v1070 = vpack.c.b16 %v714, %v710
    %v1071 = vpack.c.b16 %v715, %v711
    %v1072 = vpack.c.b16 %v716, %v712
    %v1073 = vpack.c.b16 %v717, %v713
    %v1074 = vpack.c.b16 %v722, %v718
    %v1075 = vpack.c.b16 %v723, %v719
    %v1076 = vpack.c.b16 %v724, %v720
    %v1077 = vpack.c.b16 %v725, %v721
    %v1078 = vpack.c.b16 %v730, %v726
    %v1079 = vpack.c.b16 %v731, %v727
    %v1080 = vpack.c.b16 %v732, %v728
    %v1081 = vpack.c.b16 %v733, %v729
    %v1082 = vpack.c.b16 %v738, %v734
    %v1083 = vpack.c.b16 %v739, %v735
    %v1084 = vpack.c.b16 %v740, %v736
    %v1085 = vpack.c.b16 %v741, %v737
    %v1086 = vpack.c.b16 %v746, %v742
    %v1087 = vpack.c.b16 %v747, %v743
    %v1088 = vpack.c.b16 %v748, %v744
    %v1089 = vpack.c.b16 %v749, %v745
    %v1090 = vpack.c.b16 %v754, %v750
    %v1091 = vpack.c.b16 %v755, %v751
    %v1092 = vpack.c.b16 %v756, %v752
    %v1093 = vpack.c.b16 %v757, %v753
    %v1094 = vpack.c.b16 %v762, %v758
    %v1095 = vpack.c.b16 %v763, %v759
    %v1096 = vpack.c.b16 %v764, %v760
    %v1097 = vpack.c.b16 %v765, %v761
    %v1098 = vpack.c.b16 %v770, %v766
    %v1099 = vpack.c.b16 %v771, %v767
    %v1100 = vpack.c.b16 %v772, %v768
    %v1101 = vpack.c.b16 %v773, %v769
    %v1102 = vpack.c.b16 %v778, %v774
    %v1103 = vpack.c.b16 %v779, %v775
    %v1104 = vpack.c.b16 %v780, %v776
    %v1105 = vpack.c.b16 %v781, %v777
    %v1106 = vpack.c.b16 %v786, %v782
    %v1107 = vpack.c.b16 %v787, %v783
    %v1108 = vpack.c.b16 %v788, %v784
    %v1109 = vpack.c.b16 %v789, %v785
    %v1110 = vpack.c.b16 %v794, %v790
    %v1111 = vpack.c.b16 %v795, %v791
    %v1112 = vpack.c.b16 %v796, %v792
    %v1113 = vpack.c.b16 %v797, %v793
    %v1114 = vpack.c.b16 %v802, %v798
    %v1115 = vpack.c.b16 %v803, %v799
    %v1116 = vpack.c.b16 %v804, %v800
    %v1117 = vpack.c.b16 %v805, %v801
    %v1118 = vpack.c.b16 %v810, %v806
    %v1119 = vpack.c.b16 %v811, %v807
    %v1120 = vpack.c.b16 %v812, %v808
    %v1121 = vpack.c.b16 %v813, %v809
    %v1122 = vpack.c.b16 %v818, %v814
    %v1123 = vpack.c.b16 %v819, %v815
    %v1124 = vpack.c.b16 %v820, %v816
    %v1125 = vpack.c.b16 %v821, %v817
    %v1126 = vpack.c.b16 %v826, %v822
    %v1127 = vpack.c.b16 %v827, %v823
    %v1128 = vpack.c.b16 %v828, %v824
    %v1129 = vpack.c.b16 %v829, %v825
    %v1130 = vpack.c.b16 %v834, %v830
    %v1131 = vpack.c.b16 %v835, %v831
    %v1132 = vpack.c.b16 %v836, %v832
    %v1133 = vpack.c.b16 %v837, %v833
    %v1134 = vpack.c.b16 %v842, %v838
    %v1135 = vpack.c.b16 %v843, %v839
    %v1136 = vpack.c.b16 %v844, %v840
    %v1137 = vpack.c.b16 %v845, %v841
    %v1138 = vpack.c.b16 %v850, %v846
    %v1139 = vpack.c.b16 %v851, %v847
    %v1140 = vpack.c.b16 %v852, %v848
    %v1141 = vpack.c.b16 %v853, %v849
    %v1142 = vpack.c.b16 %v858, %v854
    %v1143 = vpack.c.b16 %v859, %v855
    %v1144 = vpack.c.b16 %v860, %v856
    %v1145 = vpack.c.b16 %v861, %v857
    %v1146 = vpack.c.b16 %v866, %v862
    %v1147 = vpack.c.b16 %v867, %v863
    %v1148 = vpack.c.b16 %v868, %v864
    %v1149 = vpack.c.b16 %v869, %v865
    %v1150 = vpack.c.b16 %v874, %v870
    %v1151 = vpack.c.b16 %v875, %v871
    %v1152 = vpack.c.b16 %v876, %v872
    %v1153 = vpack.c.b16 %v877, %v873
    %v1154 = vpack.c.b16 %v882, %v878
    %v1155 = vpack.c.b16 %v883, %v879
    %v1156 = vpack.c.b16 %v884, %v880
    %v1157 = vpack.c.b16 %v885, %v881
    %v1158 = vpack.c.b16 %v890, %v886
    %v1159 = vpack.c.b16 %v891, %v887
    %v1160 = vpack.c.b16 %v892, %v888
    %v1161 = vpack.c.b16 %v893, %v889
    %v1162 = vpack.c.b16 %v898, %v894
    %v1163 = vpack.c.b16 %v899, %v895
    %v1164 = vpack.c.b16 %v900, %v896
    %v1165 = vpack.c.b16 %v901, %v897
    %v1166 = vpack.c.b16 %v906, %v902
    %v1167 = vpack.c.b16 %v907, %v903
    %v1168 = vpack.c.b16 %v908, %v904
    %v1169 = vpack.c.b16 %v909, %v905
    %v1170 = vpack.c.b16 %v914, %v910
    %v1171 = vpack.c.b16 %v915, %v911
    %v1172 = vpack.c.b16 %v916, %v912
    %v1173 = vpack.c.b16 %v917, %v913
    %v1174 = vpack.c.b16 %v922, %v918
    %v1175 = vpack.c.b16 %v923, %v919
    %v1176 = vpack.c.b16 %v924, %v920
    %v1177 = vpack.c.b16 %v925, %v921
    %v1178 = vpack.c.b16 %v930, %v926
    %v1179 = vpack.c.b16 %v931, %v927
    %v1180 = vpack.c.b16 %v932, %v928
    %v1181 = vpack.c.b16 %v933, %v929
    %v1182 = vpack.c.b16 %v938, %v934
    %v1183 = vpack.c.b16 %v939, %v935
    %v1184 = vpack.c.b16 %v940, %v936
    %v1185 = vpack.c.b16 %v941, %v937
    %v1186 = vpack.c.b16 %v946, %v942
    %v1187 = vpack.c.b16 %v947, %v943
    %v1188 = vpack.c.b16 %v948, %v944
    %v1189 = vpack.c.b16 %v949, %v945
    %v1190 = vpack.c.b16 %v954, %v950
    %v1191 = vpack.c.b16 %v955, %v951
    %v1192 = vpack.c.b16 %v956, %v952
    %v1193 = vpack.c.b16 %v957, %v953
    %v1194 = vpack.c.b16 %v962, %v958
    %v1195 = vpack.c.b16 %v963, %v959
    %v1196 = vpack.c.b16 %v964, %v960
    %v1197 = vpack.c.b16 %v965, %v961
    %v1198 = vpack.c.b16 %v970, %v966
    %v1199 = vpack.c.b16 %v971, %v967
    %v1200 = vpack.c.b16 %v972, %v968
    %v1201 = vpack.c.b16 %v973, %v969
    %v1202 = vpack.c.b16 %v978, %v974
    %v1203 = vpack.c.b16 %v979, %v975
    %v1204 = vpack.c.b16 %v980, %v976
    %v1205 = vpack.c.b16 %v981, %v977
    %v1206 = vpack.c.b16 %v986, %v982
    %v1207 = vpack.c.b16 %v987, %v983
    %v1208 = vpack.c.b16 %v988, %v984
    %v1209 = vpack.c.b16 %v989, %v985
    %v1210 = vpack.c.b16 %v994, %v990
    %v1211 = vpack.c.b16 %v995, %v991
    %v1212 = vpack.c.b16 %v996, %v992
    %v1213 = vpack.c.b16 %v997, %v993
    %v1214 = vpack.c.b16 %v1002, %v998
    %v1215 = vpack.c.b16 %v1003, %v999
    %v1216 = vpack.c.b16 %v1004, %v1000
    %v1217 = vpack.c.b16 %v1005, %v1001
    %v1218 = vpack.c.b16 %v1010, %v1006
    %v1219 = vpack.c.b16 %v1011, %v1007
    %v1220 = vpack.c.b16 %v1012, %v1008
    %v1221 = vpack.c.b16 %v1013, %v1009
    %v1222 = vpack.c.b16 %v1018, %v1014
    %v1223 = vpack.c.b16 %v1019, %v1015
    %v1224 = vpack.c.b16 %v1020, %v1016
    %v1225 = vpack.c.b16 %v1021, %v1017
    %v1226 = vpack.c.b16 %v1026, %v1022
    %v1227 = vpack.c.b16 %v1027, %v1023
    %v1228 = vpack.c.b16 %v1028, %v1024
    %v1229 = vpack.c.b16 %v1029, %v1025
    %v1230 = vpack.c.b16 %v1034, %v1030
    %v1231 = vpack.c.b16 %v1035, %v1031
    %v1232 = vpack.c.b16 %v1036, %v1032
    %v1233 = vpack.c.b16 %v1037, %v1033
    %vm1430 = vcmask 130048
    %v1432 = vsel %vm1430, %v132, 0
    %1434 = vmatprep.subr.bf16.mxu0 %v1039
    %1435 = vmatpush1.bf16.msra.mxu0 %v1038
    %1436 = vmatprep.subr.bf16.mxu0 %v1043
    %1437 = vmatpush1.bf16.msra.mxu0 %v1042
    %1438 = vmatprep.subr.bf16.mxu0 %v1047
    %1439 = vmatpush1.bf16.msra.mxu0 %v1046
    %1440 = vmatprep.subr.bf16.mxu0 %v1051
    %1441 = vmatpush1.bf16.msra.mxu0 %v1050
    %1442 = vmatprep.subr.bf16.mxu0 %v1055
    %1443 = vmatpush1.bf16.msra.mxu0 %v1054
    %1444 = vmatprep.subr.bf16.mxu0 %v1059
    %1445 = vmatpush1.bf16.msra.mxu0 %v1058
    %1446 = vmatprep.subr.bf16.mxu0 %v1063
    %1447 = vmatpush1.bf16.msra.mxu0 %v1062
    %1448 = vmatprep.subr.bf16.mxu0 %v1067
    %1449 = vmatpush1.bf16.msra.mxu0 %v1066
    %1450 = vmatprep.subr.bf16.mxu0 %v1071
    %1451 = vmatpush1.bf16.msra.mxu0 %v1070
    %1452 = vmatprep.subr.bf16.mxu0 %v1075
    %1453 = vmatpush1.bf16.msra.mxu0 %v1074
    %1454 = vmatprep.subr.bf16.mxu0 %v1079
    %1455 = vmatpush1.bf16.msra.mxu0 %v1078
    %1456 = vmatprep.subr.bf16.mxu0 %v1083
    %1457 = vmatpush1.bf16.msra.mxu0 %v1082
    %1458 = vmatprep.subr.bf16.mxu0 %v1087
    %1459 = vmatpush1.bf16.msra.mxu0 %v1086
    %1460 = vmatprep.subr.bf16.mxu0 %v1091
    %1461 = vmatpush1.bf16.msra.mxu0 %v1090
    %1462 = vmatprep.subr.bf16.mxu0 %v1095
    %1463 = vmatpush1.bf16.msra.mxu0 %v1094
    %1464 = vmatprep.subr.bf16.mxu0 %v1099
    %1465 = vmatpush1.bf16.msra.mxu0 %v1098
    %1466 = vmatprep.mubr.bf16.mxu0 %v127
    %1467 = vmatmul.mubr.bf16.gmra.mrb[0].mxu0 %v126
    %v1468 = vpop.f32.mrb[0].mxu0
    %v1469 = vadd.f32 %v403, %v1468
    %v1470 = vpop.f32.mrb[0].mxu0
    %v1471 = vadd.f32 %v405, %v1470
    %v1472 = vpop.f32.mrb[0].mxu0
    %v1473 = vpop.f32.mrb[0].mxu0
    %1474 = vdwg.mxu0
    %1475 = vmatprep.subr.bf16.mxu0 %v1103
    %1476 = vmatpush1.bf16.msra.mxu0 %v1102
    %1477 = vmatprep.subr.bf16.mxu0 %v1107
    %1478 = vmatpush1.bf16.msra.mxu0 %v1106
    %1479 = vmatprep.subr.bf16.mxu0 %v1111
    %1480 = vmatpush1.bf16.msra.mxu0 %v1110
    %1481 = vmatprep.subr.bf16.mxu0 %v1115
    %1482 = vmatpush1.bf16.msra.mxu0 %v1114
    %1483 = vmatprep.subr.bf16.mxu0 %v1119
    %1484 = vmatpush1.bf16.msra.mxu0 %v1118
    %1485 = vmatprep.subr.bf16.mxu0 %v1123
    %1486 = vmatpush1.bf16.msra.mxu0 %v1122
    %1487 = vmatprep.subr.bf16.mxu0 %v1127
    %1488 = vmatpush1.bf16.msra.mxu0 %v1126
    %1489 = vmatprep.subr.bf16.mxu0 %v1131
    %1490 = vmatpush1.bf16.msra.mxu0 %v1130
    %1491 = vmatprep.subr.bf16.mxu0 %v1135
    %1492 = vmatpush1.bf16.msra.mxu0 %v1134
    %1493 = vmatprep.subr.bf16.mxu0 %v1139
    %1494 = vmatpush1.bf16.msra.mxu0 %v1138
    %1495 = vmatprep.subr.bf16.mxu0 %v1143
    %1496 = vmatpush1.bf16.msra.mxu0 %v1142
    %1497 = vmatprep.subr.bf16.mxu0 %v1147
    %1498 = vmatpush1.bf16.msra.mxu0 %v1146
    %1499 = vmatprep.subr.bf16.mxu0 %v1151
    %1500 = vmatpush1.bf16.msra.mxu0 %v1150
    %1501 = vmatprep.subr.bf16.mxu0 %v1155
    %1502 = vmatpush1.bf16.msra.mxu0 %v1154
    %1503 = vmatprep.subr.bf16.mxu0 %v1159
    %1504 = vmatpush1.bf16.msra.mxu0 %v1158
    %1505 = vmatprep.subr.bf16.mxu0 %v1163
    %1506 = vmatpush1.bf16.msra.mxu0 %v1162
    %1507 = vmatprep.mubr.bf16.mxu0 %v129
    %1508 = vmatmul.mubr.bf16.gmra.mrb[0].mxu0 %v128
    %v1509 = vpop.f32.mrb[0].mxu0
    %v1510 = vadd.f32 %v1469, %v1509
    %v1511 = vpop.f32.mrb[0].mxu0
    %v1512 = vadd.f32 %v1471, %v1511
    %v1513 = vpop.f32.mrb[0].mxu0
    %v1514 = vpop.f32.mrb[0].mxu0
    %1515 = vdwg.mxu0
    %1516 = vmatprep.subr.bf16.mxu0 %v1167
    %1517 = vmatpush1.bf16.msra.mxu0 %v1166
    %1518 = vmatprep.subr.bf16.mxu0 %v1171
    %1519 = vmatpush1.bf16.msra.mxu0 %v1170
    %1520 = vmatprep.subr.bf16.mxu0 %v1175
    %1521 = vmatpush1.bf16.msra.mxu0 %v1174
    %1522 = vmatprep.subr.bf16.mxu0 %v1179
    %1523 = vmatpush1.bf16.msra.mxu0 %v1178
    %1524 = vmatprep.subr.bf16.mxu0 %v1183
    %1525 = vmatpush1.bf16.msra.mxu0 %v1182
    %1526 = vmatprep.subr.bf16.mxu0 %v1187
    %1527 = vmatpush1.bf16.msra.mxu0 %v1186
    %1528 = vmatprep.subr.bf16.mxu0 %v1191
    %1529 = vmatpush1.bf16.msra.mxu0 %v1190
    %1530 = vmatprep.subr.bf16.mxu0 %v1195
    %1531 = vmatpush1.bf16.msra.mxu0 %v1194
    %1532 = vmatprep.subr.bf16.mxu0 %v1199
    %1533 = vmatpush1.bf16.msra.mxu0 %v1198
    %1534 = vmatprep.subr.bf16.mxu0 %v1203
    %1535 = vmatpush1.bf16.msra.mxu0 %v1202
    %1536 = vmatprep.subr.bf16.mxu0 %v1207
    %1537 = vmatpush1.bf16.msra.mxu0 %v1206
    %1538 = vmatprep.subr.bf16.mxu0 %v1211
    %1539 = vmatpush1.bf16.msra.mxu0 %v1210
    %1540 = vmatprep.subr.bf16.mxu0 %v1215
    %1541 = vmatpush1.bf16.msra.mxu0 %v1214
    %1542 = vmatprep.subr.bf16.mxu0 %v1219
    %1543 = vmatpush1.bf16.msra.mxu0 %v1218
    %1544 = vmatprep.subr.bf16.mxu0 %v1223
    %1545 = vmatpush1.bf16.msra.mxu0 %v1222
    %1546 = vmatprep.subr.bf16.mxu0 %v1227
    %1547 = vmatpush1.bf16.msra.mxu0 %v1226
    %1548 = vmatprep.mubr.bf16.mxu0 %v131
    %1549 = vmatmul.mubr.bf16.gmra.mrb[0].mxu0 %v130
    %v1550 = vpop.f32.mrb[0].mxu0
    %v1551 = vadd.f32 %v1510, %v1550
    %v1552 = vpop.f32.mrb[0].mxu0
    %v1553 = vadd.f32 %v1512, %v1552
    %v1554 = vpop.f32.mrb[0].mxu0
    %v1555 = vpop.f32.mrb[0].mxu0
    %1556 = vdwg.mxu0
    %1557 = vmatprep.subr.bf16.mxu0 %v1231
    %1558 = vmatpush1.bf16.msra.mxu0 %v1230
    %1559 = vmatprep.subr.bf16.mxu0 0
    %1560 = vmatpush1.bf16.msra.mxu0 0
    %1561 = vmatprep.subr.bf16.mxu0 0
    %1562 = vmatpush1.bf16.msra.mxu0 0
    %1563 = vmatprep.subr.bf16.mxu0 0
    %1564 = vmatpush1.bf16.msra.mxu0 0
    %1565 = vmatprep.subr.bf16.mxu0 0
    %1566 = vmatpush1.bf16.msra.mxu0 0
    %1567 = vmatprep.subr.bf16.mxu0 0
    %1568 = vmatpush1.bf16.msra.mxu0 0
    %1569 = vmatprep.subr.bf16.mxu0 0
    %1570 = vmatpush1.bf16.msra.mxu0 0
    %1571 = vmatprep.subr.bf16.mxu0 0
    %1572 = vmatpush1.bf16.msra.mxu0 0
    %1573 = vmatprep.subr.bf16.mxu0 0
    %1574 = vmatpush1.bf16.msra.mxu0 0
    %1575 = vmatprep.subr.bf16.mxu0 0
    %1576 = vmatpush1.bf16.msra.mxu0 0
    %1577 = vmatprep.subr.bf16.mxu0 0
    %1578 = vmatpush1.bf16.msra.mxu0 0
    %1579 = vmatprep.subr.bf16.mxu0 0
    %1580 = vmatpush1.bf16.msra.mxu0 0
    %1581 = vmatprep.subr.bf16.mxu0 0
    %1582 = vmatpush1.bf16.msra.mxu0 0
    %1583 = vmatprep.subr.bf16.mxu0 0
    %1584 = vmatpush1.bf16.msra.mxu0 0
    %1585 = vmatprep.subr.bf16.mxu0 0
    %1586 = vmatpush1.bf16.msra.mxu0 0
    %1587 = vmatprep.subr.bf16.mxu0 0
    %1588 = vmatpush1.bf16.msra.mxu0 0
    %1589 = vmatprep.mubr.bf16.mxu0 0
    %1590 = vmatmul.mubr.bf16.gmra.mrb[0].mxu0 %v1432
    %v1591 = vpop.f32.mrb[0].mxu0
    %v1592 = vadd.f32 %v1551, %v1591
    %v1593 = vpop.f32.mrb[0].mxu0
    %v1594 = vadd.f32 %v1553, %v1593
    %v1595 = vpop.f32.mrb[0].mxu0
    %v1596 = vpop.f32.mrb[0].mxu0
    %1597 = vdwg.mxu0
    %1598 = vmatprep.subr.bf16.mxu0 %v1041
    %1599 = vmatpush1.bf16.msra.mxu0 %v1040
    %1600 = vmatprep.subr.bf16.mxu0 %v1045
    %1601 = vmatpush1.bf16.msra.mxu0 %v1044
    %1602 = vmatprep.subr.bf16.mxu0 %v1049
    %1603 = vmatpush1.bf16.msra.mxu0 %v1048
    %1604 = vmatprep.subr.bf16.mxu0 %v1053
    %1605 = vmatpush1.bf16.msra.mxu0 %v1052
    %1606 = vmatprep.subr.bf16.mxu0 %v1057
    %1607 = vmatpush1.bf16.msra.mxu0 %v1056
    %1608 = vmatprep.subr.bf16.mxu0 %v1061
    %1609 = vmatpush1.bf16.msra.mxu0 %v1060
    %1610 = vmatprep.subr.bf16.mxu0 %v1065
    %1611 = vmatpush1.bf16.msra.mxu0 %v1064
    %1612 = vmatprep.subr.bf16.mxu0 %v1069
    %1613 = vmatpush1.bf16.msra.mxu0 %v1068
    %1614 = vmatprep.subr.bf16.mxu0 %v1073
    %1615 = vmatpush1.bf16.msra.mxu0 %v1072
    %1616 = vmatprep.subr.bf16.mxu0 %v1077
    %1617 = vmatpush1.bf16.msra.mxu0 %v1076
    %1618 = vmatprep.subr.bf16.mxu0 %v1081
    %1619 = vmatpush1.bf16.msra.mxu0 %v1080
    %1620 = vmatprep.subr.bf16.mxu0 %v1085
    %1621 = vmatpush1.bf16.msra.mxu0 %v1084
    %1622 = vmatprep.subr.bf16.mxu0 %v1089
    %1623 = vmatpush1.bf16.msra.mxu0 %v1088
    %1624 = vmatprep.subr.bf16.mxu0 %v1093
    %1625 = vmatpush1.bf16.msra.mxu0 %v1092
    %1626 = vmatprep.subr.bf16.mxu0 %v1097
    %1627 = vmatpush1.bf16.msra.mxu0 %v1096
    %1628 = vmatprep.subr.bf16.mxu0 %v1101
    %1629 = vmatpush1.bf16.msra.mxu0 %v1100
    %1630 = vmatprep.mubr.bf16.mxu0 %v127
    %1631 = vmatmul.mubr.bf16.gmra.mrb[0].mxu0 %v126
    %v1632 = vpop.f32.mrb[0].mxu0
    %v1633 = vadd.f32 %v444, %v1632
    %v1634 = vpop.f32.mrb[0].mxu0
    %v1635 = vadd.f32 %v446, %v1634
    %v1636 = vpop.f32.mrb[0].mxu0
    %v1637 = vpop.f32.mrb[0].mxu0
    %1638 = vdwg.mxu0
    %1639 = vmatprep.subr.bf16.mxu0 %v1105
    %1640 = vmatpush1.bf16.msra.mxu0 %v1104
    %1641 = vmatprep.subr.bf16.mxu0 %v1109
    %1642 = vmatpush1.bf16.msra.mxu0 %v1108
    %1643 = vmatprep.subr.bf16.mxu0 %v1113
    %1644 = vmatpush1.bf16.msra.mxu0 %v1112
    %1645 = vmatprep.subr.bf16.mxu0 %v1117
    %1646 = vmatpush1.bf16.msra.mxu0 %v1116
    %1647 = vmatprep.subr.bf16.mxu0 %v1121
    %1648 = vmatpush1.bf16.msra.mxu0 %v1120
    %1649 = vmatprep.subr.bf16.mxu0 %v1125
    %1650 = vmatpush1.bf16.msra.mxu0 %v1124
    %1651 = vmatprep.subr.bf16.mxu0 %v1129
    %1652 = vmatpush1.bf16.msra.mxu0 %v1128
    %1653 = vmatprep.subr.bf16.mxu0 %v1133
    %1654 = vmatpush1.bf16.msra.mxu0 %v1132
    %1655 = vmatprep.subr.bf16.mxu0 %v1137
    %1656 = vmatpush1.bf16.msra.mxu0 %v1136
    %1657 = vmatprep.subr.bf16.mxu0 %v1141
    %1658 = vmatpush1.bf16.msra.mxu0 %v1140
    %1659 = vmatprep.subr.bf16.mxu0 %v1145
    %1660 = vmatpush1.bf16.msra.mxu0 %v1144
    %1661 = vmatprep.subr.bf16.mxu0 %v1149
    %1662 = vmatpush1.bf16.msra.mxu0 %v1148
    %1663 = vmatprep.subr.bf16.mxu0 %v1153
    %1664 = vmatpush1.bf16.msra.mxu0 %v1152
    %1665 = vmatprep.subr.bf16.mxu0 %v1157
    %1666 = vmatpush1.bf16.msra.mxu0 %v1156
    %1667 = vmatprep.subr.bf16.mxu0 %v1161
    %1668 = vmatpush1.bf16.msra.mxu0 %v1160
    %1669 = vmatprep.subr.bf16.mxu0 %v1165
    %1670 = vmatpush1.bf16.msra.mxu0 %v1164
    %1671 = vmatprep.mubr.bf16.mxu0 %v129
    %1672 = vmatmul.mubr.bf16.gmra.mrb[0].mxu0 %v128
    %v1673 = vpop.f32.mrb[0].mxu0
    %v1674 = vadd.f32 %v1633, %v1673
    %v1675 = vpop.f32.mrb[0].mxu0
    %v1676 = vadd.f32 %v1635, %v1675
    %v1677 = vpop.f32.mrb[0].mxu0
    %v1678 = vpop.f32.mrb[0].mxu0
    %1679 = vdwg.mxu0
    %1680 = vmatprep.subr.bf16.mxu0 %v1169
    %1681 = vmatpush1.bf16.msra.mxu0 %v1168
    %1682 = vmatprep.subr.bf16.mxu0 %v1173
    %1683 = vmatpush1.bf16.msra.mxu0 %v1172
    %1684 = vmatprep.subr.bf16.mxu0 %v1177
    %1685 = vmatpush1.bf16.msra.mxu0 %v1176
    %1686 = vmatprep.subr.bf16.mxu0 %v1181
    %1687 = vmatpush1.bf16.msra.mxu0 %v1180
    %1688 = vmatprep.subr.bf16.mxu0 %v1185
    %1689 = vmatpush1.bf16.msra.mxu0 %v1184
    %1690 = vmatprep.subr.bf16.mxu0 %v1189
    %1691 = vmatpush1.bf16.msra.mxu0 %v1188
    %1692 = vmatprep.subr.bf16.mxu0 %v1193
    %1693 = vmatpush1.bf16.msra.mxu0 %v1192
    %1694 = vmatprep.subr.bf16.mxu0 %v1197
    %1695 = vmatpush1.bf16.msra.mxu0 %v1196
    %1696 = vmatprep.subr.bf16.mxu0 %v1201
    %1697 = vmatpush1.bf16.msra.mxu0 %v1200
    %1698 = vmatprep.subr.bf16.mxu0 %v1205
    %1699 = vmatpush1.bf16.msra.mxu0 %v1204
    %1700 = vmatprep.subr.bf16.mxu0 %v1209
    %1701 = vmatpush1.bf16.msra.mxu0 %v1208
    %1702 = vmatprep.subr.bf16.mxu0 %v1213
    %1703 = vmatpush1.bf16.msra.mxu0 %v1212
    %1704 = vmatprep.subr.bf16.mxu0 %v1217
    %1705 = vmatpush1.bf16.msra.mxu0 %v1216
    %1706 = vmatprep.subr.bf16.mxu0 %v1221
    %1707 = vmatpush1.bf16.msra.mxu0 %v1220
    %1708 = vmatprep.subr.bf16.mxu0 %v1225
    %1709 = vmatpush1.bf16.msra.mxu0 %v1224
    %1710 = vmatprep.subr.bf16.mxu0 %v1229
    %1711 = vmatpush1.bf16.msra.mxu0 %v1228
    %1712 = vmatprep.mubr.bf16.mxu0 %v131
    %1713 = vmatmul.mubr.bf16.gmra.mrb[0].mxu0 %v130
    %v1714 = vpop.f32.mrb[0].mxu0
    %v1715 = vadd.f32 %v1674, %v1714
    %v1716 = vpop.f32.mrb[0].mxu0
    %v1717 = vadd.f32 %v1676, %v1716
    %v1718 = vpop.f32.mrb[0].mxu0
    %v1719 = vpop.f32.mrb[0].mxu0
    %1720 = vdwg.mxu0
    %1721 = vmatprep.subr.bf16.mxu0 %v1233
    %1722 = vmatpush1.bf16.msra.mxu0 %v1232
    %1723 = vmatprep.subr.bf16.mxu0 0
    %1724 = vmatpush1.bf16.msra.mxu0 0
    %1725 = vmatprep.subr.bf16.mxu0 0
    %1726 = vmatpush1.bf16.msra.mxu0 0
    %1727 = vmatprep.subr.bf16.mxu0 0
    %1728 = vmatpush1.bf16.msra.mxu0 0
    %1729 = vmatprep.subr.bf16.mxu0 0
    %1730 = vmatpush1.bf16.msra.mxu0 0
    %1731 = vmatprep.subr.bf16.mxu0 0
    %1732 = vmatpush1.bf16.msra.mxu0 0
    %1733 = vmatprep.subr.bf16.mxu0 0
    %1734 = vmatpush1.bf16.msra.mxu0 0
    %1735 = vmatprep.subr.bf16.mxu0 0
    %1736 = vmatpush1.bf16.msra.mxu0 0
    %1737 = vmatprep.subr.bf16.mxu0 0
    %1738 = vmatpush1.bf16.msra.mxu0 0
    %1739 = vmatprep.subr.bf16.mxu0 0
    %1740 = vmatpush1.bf16.msra.mxu0 0
    %1741 = vmatprep.subr.bf16.mxu0 0
    %1742 = vmatpush1.bf16.msra.mxu0 0
    %1743 = vmatprep.subr.bf16.mxu0 0
    %1744 = vmatpush1.bf16.msra.mxu0 0
    %1745 = vmatprep.subr.bf16.mxu0 0
    %1746 = vmatpush1.bf16.msra.mxu0 0
    %1747 = vmatprep.subr.bf16.mxu0 0
    %1748 = vmatpush1.bf16.msra.mxu0 0
    %1749 = vmatprep.subr.bf16.mxu0 0
    %1750 = vmatpush1.bf16.msra.mxu0 0
    %1751 = vmatprep.subr.bf16.mxu0 0
    %1752 = vmatpush1.bf16.msra.mxu0 0
    %1753 = vmatprep.mubr.bf16.mxu0 0
    %1754 = vmatmul.mubr.bf16.gmra.mrb[0].mxu0 %v1432
    %v1755 = vpop.f32.mrb[0].mxu0
    %v1756 = vadd.f32 %v1715, %v1755
    %v1757 = vpop.f32.mrb[0].mxu0
    %v1758 = vadd.f32 %v1717, %v1757
    %v1759 = vpop.f32.mrb[0].mxu0
    %v1760 = vpop.f32.mrb[0].mxu0
    %1761 = vdwg.mxu0
    %v1762 = vld [vmem:[%s4] sm:$0xf]
    %v1764 = vlaneseq
    %v1765 = vshrl.u32 %v1764, 7
    %v1766 = vsub.s32 0, %v1765
    %v1767 = vrot.slane %v1762, %v1766
    %v1768 = vlaneseq
    %v1769 = vshrl.u32 %v1768, 7
    %v1770 = vsub.s32 1, %v1769
    %v1771 = vrot.slane %v1762, %v1770
    %v1772 = vlaneseq
    %v1773 = vshrl.u32 %v1772, 7
    %v1774 = vsub.s32 2, %v1773
    %v1775 = vrot.slane %v1762, %v1774
    %v1776 = vlaneseq
    %v1777 = vshrl.u32 %v1776, 7
    %v1778 = vsub.s32 3, %v1777
    %v1779 = vrot.slane %v1762, %v1778
    %v1784 = vadd.f32 %v1592, %v1767
    %v1785 = vadd.f32 %v1594, %v1771
    %v1786 = vadd.f32 %v1756, %v1775
    %v1787 = vadd.f32 %v1758, %v1779
    %v1788 = vmax.f32 %v1784, 0.0
    %v1789 = vmax.f32 %v1785, 0.0
    %v1790 = vmax.f32 %v1786, 0.0
    %v1791 = vmax.f32 %v1787, 0.0
    %v1792 = vpack.c.bf16 %v1788, %v1788
    %v1793 = vpack.c.bf16 %v1789, %v1789
    %v1794 = vpack.c.bf16 %v1790, %v1790
    %v1795 = vpack.c.bf16 %v1791, %v1791
    %v1796 = vld [vmem:[#allocation10] sm:$0xff]
    %v1797 = vld [vmem:[#allocation10 + $0x8] sm:$0xff]
    %v1798 = vld [vmem:[#allocation10 + $0x10] sm:$0xff]
    %v1799 = vld [vmem:[#allocation10 + $0x18] sm:$0xff]
    %v1800 = vld [vmem:[#allocation10 + $0x20] sm:$0xff]
    %v1801 = vld [vmem:[#allocation10 + $0x28] sm:$0xff]
    %v1802 = vld [vmem:[#allocation10 + $0x30] sm:$0xff]
    %v1803 = vld [vmem:[#allocation10 + $0x38] sm:$0xff]
    %v1804 = vld [vmem:[#allocation10 + $0x40] sm:$0xff]
    %v1805 = vld [vmem:[#allocation10 + $0x48] sm:$0xff]
    %v1806 = vld [vmem:[#allocation10 + $0x50] sm:$0xff]
    %v1807 = vld [vmem:[#allocation10 + $0x58] sm:$0xff]
    %v1808 = vld [vmem:[#allocation10 + $0x60] sm:$0xff]
    %v1809 = vld [vmem:[#allocation10 + $0x68] sm:$0xff]
    %v1810 = vld [vmem:[#allocation10 + $0x70] sm:$0xff]
    %v1811 = vld [vmem:[#allocation10 + $0x78] sm:$0xff]
    %v1812 = vld [vmem:[#allocation10 + $0x80] sm:$0xff]
    %v1813 = vld [vmem:[#allocation10 + $0x88] sm:$0xff]
    %v1814 = vld [vmem:[#allocation10 + $0x90] sm:$0xff]
    %v1815 = vld [vmem:[#allocation10 + $0x98] sm:$0xff]
    %v1816 = vld [vmem:[#allocation10 + $0xa0] sm:$0xff]
    %v1817 = vld [vmem:[#allocation10 + $0xa8] sm:$0xff]
    %v1818 = vld [vmem:[#allocation10 + $0xb0] sm:$0xff]
    %v1819 = vld [vmem:[#allocation10 + $0xb8] sm:$0xff]
    %v1820 = vld [vmem:[#allocation10 + $0xc0] sm:$0xff]
    %v1821 = vld [vmem:[#allocation10 + $0xc8] sm:$0xff]
    %v1822 = vld [vmem:[#allocation10 + $0xd0] sm:$0xff]
    %v1823 = vld [vmem:[#allocation10 + $0xd8] sm:$0xff]
    %v1824 = vld [vmem:[#allocation10 + $0xe0] sm:$0xff]
    %v1825 = vld [vmem:[#allocation10 + $0xe8] sm:$0xff]
    %v1826 = vld [vmem:[#allocation10 + $0xf0] sm:$0xff]
    %v1827 = vld [vmem:[#allocation10 + $0xf8] sm:$0xff]
    %v1828 = vld [vmem:[#allocation10 + $0x100] sm:$0xff]
    %v1829 = vld [vmem:[#allocation10 + $0x108] sm:$0xff]
    %v1830 = vld [vmem:[#allocation10 + $0x110] sm:$0xff]
    %v1831 = vld [vmem:[#allocation10 + $0x118] sm:$0xff]
    %v1832 = vld [vmem:[#allocation10 + $0x120] sm:$0xff]
    %v1833 = vld [vmem:[#allocation10 + $0x128] sm:$0xff]
    %v1834 = vld [vmem:[#allocation10 + $0x130] sm:$0xff]
    %v1835 = vld [vmem:[#allocation10 + $0x138] sm:$0xff]
    %v1836 = vld [vmem:[#allocation10 + $0x140] sm:$0xff]
    %v1837 = vld [vmem:[#allocation10 + $0x148] sm:$0xff]
    %v1838 = vld [vmem:[#allocation10 + $0x150] sm:$0xff]
    %v1839 = vld [vmem:[#allocation10 + $0x158] sm:$0xff]
    %v1840 = vld [vmem:[#allocation10 + $0x160] sm:$0xff]
    %v1841 = vld [vmem:[#allocation10 + $0x168] sm:$0xff]
    %v1842 = vld [vmem:[#allocation10 + $0x170] sm:$0xff]
    %v1843 = vld [vmem:[#allocation10 + $0x178] sm:$0xff]
    %v1844 = vld [vmem:[#allocation10 + $0x180] sm:$0xff]
    %v1845 = vld [vmem:[#allocation10 + $0x188] sm:$0xff]
    %v1846 = vld [vmem:[#allocation10 + $0x190] sm:$0xff]
    %v1847 = vld [vmem:[#allocation10 + $0x198] sm:$0xff]
    %v1848 = vld [vmem:[#allocation10 + $0x1a0] sm:$0xff]
    %v1849 = vld [vmem:[#allocation10 + $0x1a8] sm:$0xff]
    %v1850 = vld [vmem:[#allocation10 + $0x1b0] sm:$0xff]
    %v1851 = vld [vmem:[#allocation10 + $0x1b8] sm:$0xff]
    %v1852 = vld [vmem:[#allocation10 + $0x1c0] sm:$0xff]
    %v1853 = vld [vmem:[#allocation10 + $0x1c8] sm:$0xff]
    %v1854 = vld [vmem:[#allocation10 + $0x1d0] sm:$0xff]
    %v1855 = vld [vmem:[#allocation10 + $0x1d8] sm:$0xff]
    %v1856 = vld [vmem:[#allocation10 + $0x1e0] sm:$0xff]
    %v1857 = vld [vmem:[#allocation10 + $0x1e8] sm:$0xff]
    %v1858 = vld [vmem:[#allocation10 + $0x1f0] sm:$0xff]
    %v1859 = vld [vmem:[#allocation10 + $0x1f8] sm:$0xff]
    %v1860 = vld [vmem:[%s6] sm:$0x3]
    %v1862 = vlaneseq
    %v1863 = vshrl.u32 %v1862, 7
    %v1864 = vsub.s32 0, %v1863
    %v1865 = vrot.slane %v1860, %v1864
    %v1866 = vlaneseq
    %v1867 = vshrl.u32 %v1866, 7
    %v1868 = vsub.s32 1, %v1867
    %v1869 = vrot.slane %v1860, %v1868
    %v1936 = vunpack.c.l.b16 %v1796
    %v1937 = vunpack.c.h.b16 %v1796
    %v1938 = vunpack.c.l.b16 %v1797
    %v1939 = vunpack.c.h.b16 %v1797
    %v1940 = vunpack.c.l.b16 %v1798
    %v1941 = vunpack.c.h.b16 %v1798
    %v1942 = vunpack.c.l.b16 %v1799
    %v1943 = vunpack.c.h.b16 %v1799
    %v1944 = vunpack.c.l.b16 %v1800
    %v1945 = vunpack.c.h.b16 %v1800
    %v1946 = vunpack.c.l.b16 %v1801
    %v1947 = vunpack.c.h.b16 %v1801
    %v1948 = vunpack.c.l.b16 %v1802
    %v1949 = vunpack.c.h.b16 %v1802
    %v1950 = vunpack.c.l.b16 %v1803
    %v1951 = vunpack.c.h.b16 %v1803
    %v1952 = vunpack.c.l.b16 %v1804
    %v1953 = vunpack.c.h.b16 %v1804
    %v1954 = vunpack.c.l.b16 %v1805
    %v1955 = vunpack.c.h.b16 %v1805
    %v1956 = vunpack.c.l.b16 %v1806
    %v1957 = vunpack.c.h.b16 %v1806
    %v1958 = vunpack.c.l.b16 %v1807
    %v1959 = vunpack.c.h.b16 %v1807
    %v1960 = vunpack.c.l.b16 %v1808
    %v1961 = vunpack.c.h.b16 %v1808
    %v1962 = vunpack.c.l.b16 %v1809
    %v1963 = vunpack.c.h.b16 %v1809
    %v1964 = vunpack.c.l.b16 %v1810
    %v1965 = vunpack.c.h.b16 %v1810
    %v1966 = vunpack.c.l.b16 %v1811
    %v1967 = vunpack.c.h.b16 %v1811
    %v1968 = vunpack.c.l.b16 %v1812
    %v1969 = vunpack.c.h.b16 %v1812
    %v1970 = vunpack.c.l.b16 %v1813
    %v1971 = vunpack.c.h.b16 %v1813
    %v1972 = vunpack.c.l.b16 %v1814
    %v1973 = vunpack.c.h.b16 %v1814
    %v1974 = vunpack.c.l.b16 %v1815
    %v1975 = vunpack.c.h.b16 %v1815
    %v1976 = vunpack.c.l.b16 %v1816
    %v1977 = vunpack.c.h.b16 %v1816
    %v1978 = vunpack.c.l.b16 %v1817
    %v1979 = vunpack.c.h.b16 %v1817
    %v1980 = vunpack.c.l.b16 %v1818
    %v1981 = vunpack.c.h.b16 %v1818
    %v1982 = vunpack.c.l.b16 %v1819
    %v1983 = vunpack.c.h.b16 %v1819
    %v1984 = vunpack.c.l.b16 %v1820
    %v1985 = vunpack.c.h.b16 %v1820
    %v1986 = vunpack.c.l.b16 %v1821
    %v1987 = vunpack.c.h.b16 %v1821
    %v1988 = vunpack.c.l.b16 %v1822
    %v1989 = vunpack.c.h.b16 %v1822
    %v1990 = vunpack.c.l.b16 %v1823
    %v1991 = vunpack.c.h.b16 %v1823
    %v1992 = vunpack.c.l.b16 %v1824
    %v1993 = vunpack.c.h.b16 %v1824
    %v1994 = vunpack.c.l.b16 %v1825
    %v1995 = vunpack.c.h.b16 %v1825
    %v1996 = vunpack.c.l.b16 %v1826
    %v1997 = vunpack.c.h.b16 %v1826
    %v1998 = vunpack.c.l.b16 %v1827
    %v1999 = vunpack.c.h.b16 %v1827
    %v2000 = vunpack.c.l.b16 %v1828
    %v2001 = vunpack.c.h.b16 %v1828
    %v2002 = vunpack.c.l.b16 %v1829
    %v2003 = vunpack.c.h.b16 %v1829
    %v2004 = vunpack.c.l.b16 %v1830
    %v2005 = vunpack.c.h.b16 %v1830
    %v2006 = vunpack.c.l.b16 %v1831
    %v2007 = vunpack.c.h.b16 %v1831
    %v2008 = vunpack.c.l.b16 %v1832
    %v2009 = vunpack.c.h.b16 %v1832
    %v2010 = vunpack.c.l.b16 %v1833
    %v2011 = vunpack.c.h.b16 %v1833
    %v2012 = vunpack.c.l.b16 %v1834
    %v2013 = vunpack.c.h.b16 %v1834
    %v2014 = vunpack.c.l.b16 %v1835
    %v2015 = vunpack.c.h.b16 %v1835
    %v2016 = vunpack.c.l.b16 %v1836
    %v2017 = vunpack.c.h.b16 %v1836
    %v2018 = vunpack.c.l.b16 %v1837
    %v2019 = vunpack.c.h.b16 %v1837
    %v2020 = vunpack.c.l.b16 %v1838
    %v2021 = vunpack.c.h.b16 %v1838
    %v2022 = vunpack.c.l.b16 %v1839
    %v2023 = vunpack.c.h.b16 %v1839
    %v2024 = vunpack.c.l.b16 %v1840
    %v2025 = vunpack.c.h.b16 %v1840
    %v2026 = vunpack.c.l.b16 %v1841
    %v2027 = vunpack.c.h.b16 %v1841
    %v2028 = vunpack.c.l.b16 %v1842
    %v2029 = vunpack.c.h.b16 %v1842
    %v2030 = vunpack.c.l.b16 %v1843
    %v2031 = vunpack.c.h.b16 %v1843
    %v2032 = vunpack.c.l.b16 %v1844
    %v2033 = vunpack.c.h.b16 %v1844
    %v2034 = vunpack.c.l.b16 %v1845
    %v2035 = vunpack.c.h.b16 %v1845
    %v2036 = vunpack.c.l.b16 %v1846
    %v2037 = vunpack.c.h.b16 %v1846
    %v2038 = vunpack.c.l.b16 %v1847
    %v2039 = vunpack.c.h.b16 %v1847
    %v2040 = vunpack.c.l.b16 %v1848
    %v2041 = vunpack.c.h.b16 %v1848
    %v2042 = vunpack.c.l.b16 %v1849
    %v2043 = vunpack.c.h.b16 %v1849
    %v2044 = vunpack.c.l.b16 %v1850
    %v2045 = vunpack.c.h.b16 %v1850
    %v2046 = vunpack.c.l.b16 %v1851
    %v2047 = vunpack.c.h.b16 %v1851
    %v2048 = vunpack.c.l.b16 %v1852
    %v2049 = vunpack.c.h.b16 %v1852
    %v2050 = vunpack.c.l.b16 %v1853
    %v2051 = vunpack.c.h.b16 %v1853
    %v2052 = vunpack.c.l.b16 %v1854
    %v2053 = vunpack.c.h.b16 %v1854
    %v2054 = vunpack.c.l.b16 %v1855
    %v2055 = vunpack.c.h.b16 %v1855
    %v2056 = vunpack.c.l.b16 %v1856
    %v2057 = vunpack.c.h.b16 %v1856
    %v2058 = vunpack.c.l.b16 %v1857
    %v2059 = vunpack.c.h.b16 %v1857
    %v2060 = vunpack.c.l.b16 %v1858
    %v2061 = vunpack.c.h.b16 %v1858
    %v2062 = vunpack.c.l.b16 %v1859
    %v2063 = vunpack.c.h.b16 %v1859
    %v2064 = vpack.c.b16 %v1938, %v1936
    %v2065 = vpack.c.b16 %v1939, %v1937
    %v2066 = vpack.c.b16 %v1942, %v1940
    %v2067 = vpack.c.b16 %v1943, %v1941
    %v2068 = vpack.c.b16 %v1946, %v1944
    %v2069 = vpack.c.b16 %v1947, %v1945
    %v2070 = vpack.c.b16 %v1950, %v1948
    %v2071 = vpack.c.b16 %v1951, %v1949
    %v2072 = vpack.c.b16 %v1954, %v1952
    %v2073 = vpack.c.b16 %v1955, %v1953
    %v2074 = vpack.c.b16 %v1958, %v1956
    %v2075 = vpack.c.b16 %v1959, %v1957
    %v2076 = vpack.c.b16 %v1962, %v1960
    %v2077 = vpack.c.b16 %v1963, %v1961
    %v2078 = vpack.c.b16 %v1966, %v1964
    %v2079 = vpack.c.b16 %v1967, %v1965
    %v2080 = vpack.c.b16 %v1970, %v1968
    %v2081 = vpack.c.b16 %v1971, %v1969
    %v2082 = vpack.c.b16 %v1974, %v1972
    %v2083 = vpack.c.b16 %v1975, %v1973
    %v2084 = vpack.c.b16 %v1978, %v1976
    %v2085 = vpack.c.b16 %v1979, %v1977
    %v2086 = vpack.c.b16 %v1982, %v1980
    %v2087 = vpack.c.b16 %v1983, %v1981
    %v2088 = vpack.c.b16 %v1986, %v1984
    %v2089 = vpack.c.b16 %v1987, %v1985
    %v2090 = vpack.c.b16 %v1990, %v1988
    %v2091 = vpack.c.b16 %v1991, %v1989
    %v2092 = vpack.c.b16 %v1994, %v1992
    %v2093 = vpack.c.b16 %v1995, %v1993
    %v2094 = vpack.c.b16 %v1998, %v1996
    %v2095 = vpack.c.b16 %v1999, %v1997
    %v2096 = vpack.c.b16 %v2002, %v2000
    %v2097 = vpack.c.b16 %v2003, %v2001
    %v2098 = vpack.c.b16 %v2006, %v2004
    %v2099 = vpack.c.b16 %v2007, %v2005
    %v2100 = vpack.c.b16 %v2010, %v2008
    %v2101 = vpack.c.b16 %v2011, %v2009
    %v2102 = vpack.c.b16 %v2014, %v2012
    %v2103 = vpack.c.b16 %v2015, %v2013
    %v2104 = vpack.c.b16 %v2018, %v2016
    %v2105 = vpack.c.b16 %v2019, %v2017
    %v2106 = vpack.c.b16 %v2022, %v2020
    %v2107 = vpack.c.b16 %v2023, %v2021
    %v2108 = vpack.c.b16 %v2026, %v2024
    %v2109 = vpack.c.b16 %v2027, %v2025
    %v2110 = vpack.c.b16 %v2030, %v2028
    %v2111 = vpack.c.b16 %v2031, %v2029
    %v2112 = vpack.c.b16 %v2034, %v2032
    %v2113 = vpack.c.b16 %v2035, %v2033
    %v2114 = vpack.c.b16 %v2038, %v2036
    %v2115 = vpack.c.b16 %v2039, %v2037
    %v2116 = vpack.c.b16 %v2042, %v2040
    %v2117 = vpack.c.b16 %v2043, %v2041
    %v2118 = vpack.c.b16 %v2046, %v2044
    %v2119 = vpack.c.b16 %v2047, %v2045
    %v2120 = vpack.c.b16 %v2050, %v2048
    %v2121 = vpack.c.b16 %v2051, %v2049
    %v2122 = vpack.c.b16 %v2054, %v2052
    %v2123 = vpack.c.b16 %v2055, %v2053
    %v2124 = vpack.c.b16 %v2058, %v2056
    %v2125 = vpack.c.b16 %v2059, %v2057
    %v2126 = vpack.c.b16 %v2062, %v2060
    %v2127 = vpack.c.b16 %v2063, %v2061
    %2192 = vmatprep.subr.bf16.mxu0 %v2065
    %2193 = vmatpush1.bf16.msra.mxu0 %v2064
    %2194 = vmatprep.subr.bf16.mxu0 %v2067
    %2195 = vmatpush1.bf16.msra.mxu0 %v2066
    %2196 = vmatprep.subr.bf16.mxu0 %v2069
    %2197 = vmatpush1.bf16.msra.mxu0 %v2068
    %2198 = vmatprep.subr.bf16.mxu0 %v2071
    %2199 = vmatpush1.bf16.msra.mxu0 %v2070
    %2200 = vmatprep.subr.bf16.mxu0 %v2073
    %2201 = vmatpush1.bf16.msra.mxu0 %v2072
    %2202 = vmatprep.subr.bf16.mxu0 %v2075
    %2203 = vmatpush1.bf16.msra.mxu0 %v2074
    %2204 = vmatprep.subr.bf16.mxu0 %v2077
    %2205 = vmatpush1.bf16.msra.mxu0 %v2076
    %2206 = vmatprep.subr.bf16.mxu0 %v2079
    %2207 = vmatpush1.bf16.msra.mxu0 %v2078
    %2208 = vmatprep.subr.bf16.mxu0 %v2081
    %2209 = vmatpush1.bf16.msra.mxu0 %v2080
    %2210 = vmatprep.subr.bf16.mxu0 %v2083
    %2211 = vmatpush1.bf16.msra.mxu0 %v2082
    %2212 = vmatprep.subr.bf16.mxu0 %v2085
    %2213 = vmatpush1.bf16.msra.mxu0 %v2084
    %2214 = vmatprep.subr.bf16.mxu0 %v2087
    %2215 = vmatpush1.bf16.msra.mxu0 %v2086
    %2216 = vmatprep.subr.bf16.mxu0 %v2089
    %2217 = vmatpush1.bf16.msra.mxu0 %v2088
    %2218 = vmatprep.subr.bf16.mxu0 %v2091
    %2219 = vmatpush1.bf16.msra.mxu0 %v2090
    %2220 = vmatprep.subr.bf16.mxu0 %v2093
    %2221 = vmatpush1.bf16.msra.mxu0 %v2092
    %2222 = vmatprep.subr.bf16.mxu0 %v2095
    %2223 = vmatpush1.bf16.msra.mxu0 %v2094
    %2224 = vmatprep.mubr.bf16.mxu0 %v1793
    %2225 = vmatmul.mubr.bf16.gmra.mrb[0].mxu0 %v1792
    %v2226 = vpop.f32.mrb[0].mxu0
    %v2227 = vadd.f32 %v1865, %v2226
    %v2228 = vpop.f32.mrb[0].mxu0
    %v2229 = vadd.f32 %v1869, %v2228
    %v2230 = vpop.f32.mrb[0].mxu0
    %v2231 = vpop.f32.mrb[0].mxu0
    %2232 = vdwg.mxu0
    %2233 = vmatprep.subr.bf16.mxu0 %v2097
    %2234 = vmatpush1.bf16.msra.mxu0 %v2096
    %2235 = vmatprep.subr.bf16.mxu0 %v2099
    %2236 = vmatpush1.bf16.msra.mxu0 %v2098
    %2237 = vmatprep.subr.bf16.mxu0 %v2101
    %2238 = vmatpush1.bf16.msra.mxu0 %v2100
    %2239 = vmatprep.subr.bf16.mxu0 %v2103
    %2240 = vmatpush1.bf16.msra.mxu0 %v2102
    %2241 = vmatprep.subr.bf16.mxu0 %v2105
    %2242 = vmatpush1.bf16.msra.mxu0 %v2104
    %2243 = vmatprep.subr.bf16.mxu0 %v2107
    %2244 = vmatpush1.bf16.msra.mxu0 %v2106
    %2245 = vmatprep.subr.bf16.mxu0 %v2109
    %2246 = vmatpush1.bf16.msra.mxu0 %v2108
    %2247 = vmatprep.subr.bf16.mxu0 %v2111
    %2248 = vmatpush1.bf16.msra.mxu0 %v2110
    %2249 = vmatprep.subr.bf16.mxu0 %v2113
    %2250 = vmatpush1.bf16.msra.mxu0 %v2112
    %2251 = vmatprep.subr.bf16.mxu0 %v2115
    %2252 = vmatpush1.bf16.msra.mxu0 %v2114
    %2253 = vmatprep.subr.bf16.mxu0 %v2117
    %2254 = vmatpush1.bf16.msra.mxu0 %v2116
    %2255 = vmatprep.subr.bf16.mxu0 %v2119
    %2256 = vmatpush1.bf16.msra.mxu0 %v2118
    %2257 = vmatprep.subr.bf16.mxu0 %v2121
    %2258 = vmatpush1.bf16.msra.mxu0 %v2120
    %2259 = vmatprep.subr.bf16.mxu0 %v2123
    %2260 = vmatpush1.bf16.msra.mxu0 %v2122
    %2261 = vmatprep.subr.bf16.mxu0 %v2125
    %2262 = vmatpush1.bf16.msra.mxu0 %v2124
    %2263 = vmatprep.subr.bf16.mxu0 %v2127
    %2264 = vmatpush1.bf16.msra.mxu0 %v2126
    %2265 = vmatprep.mubr.bf16.mxu0 %v1795
    %2266 = vmatmul.mubr.bf16.gmra.mrb[0].mxu0 %v1794
    %v2267 = vpop.f32.mrb[0].mxu0
    %v2268 = vadd.f32 %v2227, %v2267
    %v2269 = vpop.f32.mrb[0].mxu0
    %v2270 = vadd.f32 %v2229, %v2269
    %v2271 = vpop.f32.mrb[0].mxu0
    %v2272 = vpop.f32.mrb[0].mxu0
    %2273 = vdwg.mxu0
    %v2274 = vmax.f32 %v2268, 0.0
    %v2275 = vmax.f32 %v2270, 0.0
    %v2276 = vpack.c.bf16 %v2274, %v2274
    %v2277 = vpack.c.bf16 %v2275, %v2275
    %v2278 = vld [vmem:[#allocation11] sm:$0xf]
    %v2279 = vld [vmem:[#allocation11 + $0x4] sm:$0xf]
    %v2280 = vld [vmem:[#allocation11 + $0x8] sm:$0xf]
    %v2281 = vld [vmem:[#allocation11 + $0xc] sm:$0xf]
    %v2282 = vld [vmem:[#allocation11 + $0x10] sm:$0xf]
    %v2283 = vld [vmem:[#allocation11 + $0x14] sm:$0xf]
    %v2284 = vld [vmem:[#allocation11 + $0x18] sm:$0xf]
    %v2285 = vld [vmem:[#allocation11 + $0x1c] sm:$0xf]
    %v2286 = vld [vmem:[#allocation11 + $0x20] sm:$0xf]
    %v2287 = vld [vmem:[#allocation11 + $0x24] sm:$0xf]
    %v2288 = vld [vmem:[#allocation11 + $0x28] sm:$0xf]
    %v2289 = vld [vmem:[#allocation11 + $0x2c] sm:$0xf]
    %v2290 = vld [vmem:[#allocation11 + $0x30] sm:$0xf]
    %v2291 = vld [vmem:[#allocation11 + $0x34] sm:$0xf]
    %v2292 = vld [vmem:[#allocation11 + $0x38] sm:$0xf]
    %v2293 = vld [vmem:[#allocation11 + $0x3c] sm:$0xf]
    %v2294 = vld [vmem:[#allocation11 + $0x40] sm:$0xf]
    %v2295 = vld [vmem:[#allocation11 + $0x44] sm:$0xf]
    %v2296 = vld [vmem:[#allocation11 + $0x48] sm:$0xf]
    %v2297 = vld [vmem:[#allocation11 + $0x4c] sm:$0xf]
    %v2298 = vld [vmem:[#allocation11 + $0x50] sm:$0xf]
    %v2299 = vld [vmem:[#allocation11 + $0x54] sm:$0xf]
    %v2300 = vld [vmem:[#allocation11 + $0x58] sm:$0xf]
    %v2301 = vld [vmem:[#allocation11 + $0x5c] sm:$0xf]
    %v2302 = vld [vmem:[#allocation11 + $0x60] sm:$0xf]
    %v2303 = vld [vmem:[#allocation11 + $0x64] sm:$0xf]
    %v2304 = vld [vmem:[#allocation11 + $0x68] sm:$0xf]
    %v2305 = vld [vmem:[#allocation11 + $0x6c] sm:$0xf]
    %v2306 = vld [vmem:[#allocation11 + $0x70] sm:$0xf]
    %v2307 = vld [vmem:[#allocation11 + $0x74] sm:$0xf]
    %v2308 = vld [vmem:[#allocation11 + $0x78] sm:$0xf]
    %v2309 = vld [vmem:[#allocation11 + $0x7c] sm:$0xf]
    %v2310 = vld [vmem:[%s8] sm:$0x1]
    %v2312 = vlaneseq
    %v2313 = vshrl.u32 %v2312, 7
    %v2314 = vsub.s32 0, %v2313
    %v2315 = vrot.slane %v2310, %v2314
    %v2349 = vunpack.c.l.b16 %v2278
    %v2350 = vunpack.c.l.b16 %v2279
    %v2351 = vunpack.c.l.b16 %v2280
    %v2352 = vunpack.c.l.b16 %v2281
    %v2353 = vunpack.c.l.b16 %v2282
    %v2354 = vunpack.c.l.b16 %v2283
    %v2355 = vunpack.c.l.b16 %v2284
    %v2356 = vunpack.c.l.b16 %v2285
    %v2357 = vunpack.c.l.b16 %v2286
    %v2358 = vunpack.c.l.b16 %v2287
    %v2359 = vunpack.c.l.b16 %v2288
    %v2360 = vunpack.c.l.b16 %v2289
    %v2361 = vunpack.c.l.b16 %v2290
    %v2362 = vunpack.c.l.b16 %v2291
    %v2363 = vunpack.c.l.b16 %v2292
    %v2364 = vunpack.c.l.b16 %v2293
    %v2365 = vunpack.c.l.b16 %v2294
    %v2366 = vunpack.c.l.b16 %v2295
    %v2367 = vunpack.c.l.b16 %v2296
    %v2368 = vunpack.c.l.b16 %v2297
    %v2369 = vunpack.c.l.b16 %v2298
    %v2370 = vunpack.c.l.b16 %v2299
    %v2371 = vunpack.c.l.b16 %v2300
    %v2372 = vunpack.c.l.b16 %v2301
    %v2373 = vunpack.c.l.b16 %v2302
    %v2374 = vunpack.c.l.b16 %v2303
    %v2375 = vunpack.c.l.b16 %v2304
    %v2376 = vunpack.c.l.b16 %v2305
    %v2377 = vunpack.c.l.b16 %v2306
    %v2378 = vunpack.c.l.b16 %v2307
    %v2379 = vunpack.c.l.b16 %v2308
    %v2380 = vunpack.c.l.b16 %v2309
    %v2381 = vpack.c.b16 %v2350, %v2349
    %v2382 = vpack.c.b16 %v2352, %v2351
    %v2383 = vpack.c.b16 %v2354, %v2353
    %v2384 = vpack.c.b16 %v2356, %v2355
    %v2385 = vpack.c.b16 %v2358, %v2357
    %v2386 = vpack.c.b16 %v2360, %v2359
    %v2387 = vpack.c.b16 %v2362, %v2361
    %v2388 = vpack.c.b16 %v2364, %v2363
    %v2389 = vpack.c.b16 %v2366, %v2365
    %v2390 = vpack.c.b16 %v2368, %v2367
    %v2391 = vpack.c.b16 %v2370, %v2369
    %v2392 = vpack.c.b16 %v2372, %v2371
    %v2393 = vpack.c.b16 %v2374, %v2373
    %v2394 = vpack.c.b16 %v2376, %v2375
    %v2395 = vpack.c.b16 %v2378, %v2377
    %v2396 = vpack.c.b16 %v2380, %v2379
    %2413 = vmatprep.subr.bf16.mxu0 0
    %2414 = vmatpush1.bf16.msra.mxu0 %v2381
    %2415 = vmatprep.subr.bf16.mxu0 0
    %2416 = vmatpush1.bf16.msra.mxu0 %v2382
    %2417 = vmatprep.subr.bf16.mxu0 0
    %2418 = vmatpush1.bf16.msra.mxu0 %v2383
    %2419 = vmatprep.subr.bf16.mxu0 0
    %2420 = vmatpush1.bf16.msra.mxu0 %v2384
    %2421 = vmatprep.subr.bf16.mxu0 0
    %2422 = vmatpush1.bf16.msra.mxu0 %v2385
    %2423 = vmatprep.subr.bf16.mxu0 0
    %2424 = vmatpush1.bf16.msra.mxu0 %v2386
    %2425 = vmatprep.subr.bf16.mxu0 0
    %2426 = vmatpush1.bf16.msra.mxu0 %v2387
    %2427 = vmatprep.subr.bf16.mxu0 0
    %2428 = vmatpush1.bf16.msra.mxu0 %v2388
    %2429 = vmatprep.subr.bf16.mxu0 0
    %2430 = vmatpush1.bf16.msra.mxu0 %v2389
    %2431 = vmatprep.subr.bf16.mxu0 0
    %2432 = vmatpush1.bf16.msra.mxu0 %v2390
    %2433 = vmatprep.subr.bf16.mxu0 0
    %2434 = vmatpush1.bf16.msra.mxu0 %v2391
    %2435 = vmatprep.subr.bf16.mxu0 0
    %2436 = vmatpush1.bf16.msra.mxu0 %v2392
    %2437 = vmatprep.subr.bf16.mxu0 0
    %2438 = vmatpush1.bf16.msra.mxu0 %v2393
    %2439 = vmatprep.subr.bf16.mxu0 0
    %2440 = vmatpush1.bf16.msra.mxu0 %v2394
    %2441 = vmatprep.subr.bf16.mxu0 0
    %2442 = vmatpush1.bf16.msra.mxu0 %v2395
    %2443 = vmatprep.subr.bf16.mxu0 0
    %2444 = vmatpush1.bf16.msra.mxu0 %v2396
    %2445 = vmatprep.mubr.bf16.mxu0 %v2277
    %2446 = vmatmul.mubr.bf16.gmra.mrb[0].mxu0 %v2276
    %v2447 = vpop.f32.mrb[0].mxu0
    %v2448 = vadd.f32 %v2315, %v2447
    %v2449 = vpop.f32.mrb[0].mxu0
    %v2450 = vpop.f32.mrb[0].mxu0
    %v2451 = vpop.f32.mrb[0].mxu0
    %2452 = vdwg.mxu0
    %v2453 = vmax.f32 %v2448, 0.0
    %v2454 = vld [vmem:[%s9] sm:$0x1]
    %v2455 = vunpack.c.l.bf16 %v2454
    %v2456 = vlaneseq
    %v2457 = vshrl.u32 %v2456, 7
    %v2458 = vsub.s32 0, %v2457
    %v2459 = vrot.slane %v2455, %v2458
    %v2460 = vmul.f32 %v2453, %v2459
    %2461 = vadd.xlane.f32.xlu0 %v2460
    %v2462 = vpop.xlane.xlu0 %2461
    %v2463 = vld [vmem:[#allocation2] sm:$0x1]
    %v2465 = vlaneseq
    %v2466 = vshrl.u32 %v2465, 7
    %v2467 = vsub.s32 0, %v2466
    %v2468 = vrot.slane %v2463, %v2467
    %v2470 = vadd.f32 %v2462, %v2468
    %v2471 = vxor.u32 %v2470, 2147483648
    %v2472 = vmul.f32 %v2471, 1.442695
    %v2473 = vpow.pop %v2472
    %v2474 = vadd.f32 %v2473, 1.0
    %v2475 = vrcp.pop %v2474
    %v2476 = vmul.f32 1.0, %v2475
    %vm2477 = vcmask 7168
    %2478 = vst.msk [vmem:[%s11] sm:$0xff] %vm2477, %v2476
    // Predicated region
    $region70: #{tpu_custom_call.1} parent=1 // pred_check
      _
    $region71: #{tpu_custom_call.1} parent=1 // pred_check_branch
      %2480 = sbr.rel (0) target = $region73
    $region72: #{tpu_custom_call.1} parent=1 // pred_region
      _
    $region73: #{tpu_custom_call.1} parent=1 // pred_fallthru
      _
    // Predicated region
    $region74: #{tpu_custom_call.1} parent=1 // pred_check
      _
    $region75: #{tpu_custom_call.1} parent=1 // pred_check_branch
      %2482 = sbr.rel (0) target = $region77
    $region76: #{tpu_custom_call.1} parent=1 // pred_region
      _
    $region77: #{tpu_custom_call.1} parent=1 // pred_fallthru
      _
    %2483 = vsyncpa [#allocation4], 1
    %2484 = vsyncpa [#allocation6], 1
    %2485 = vsyncpa [#allocation9], 1
    %2486 = vsyncpa [#allocation12], 1

</llo_original>
